<compile_context>
chip_gen: v7x
topology: tpu7x:2x2x1
jax: 0.10.0
libtpu: 0.0.40
codegen_flags: <defaults>
</compile_context>

<pallas_src>
import jax
import jax.numpy as jnp
from jax.experimental import pallas as pl
from jax.experimental.pallas import tpu as pltpu

LEAK = 0.05
BN_EPS = 1e-5
_LANE = 128
_TM_SMALL_K = 2048        # conv1: K=16, matmul is tiny -> big row tiles
_TM_MATMUL = 512          # BN conv matmul passes
_TM_ELEMENTWISE = 2048    # BN pass 2 (trivial FMA) tile cap


# --------------------------------------------------------------------------
# small helpers
# --------------------------------------------------------------------------
def _round_up(x, m):
    return -(-x // m) * m


def _choose_tm(m, target):
    """Row tile: large for pipelining, but split small problems into >= 2
    tiles so a "parallel" grid axis can shard across both v7x TensorCores."""
    if m >= 2 * target:
        return target
    return max(8, _round_up(-(-m // 2), 8))


def _grow_tm(mp, tm, cap):
    """Grow the elementwise-pass tile by an integer factor that still divides
    the (already tm-padded) row count mp, staying under `cap`."""
    nt = mp // tm
    f = min(nt, max(1, cap // tm))
    while nt % f:
        f -= 1
    return tm * f


def _pad_rows(p, tm):
    m = p.shape[0]
    mp = _round_up(m, tm)
    if mp != m:
        p = jnp.pad(p, ((0, mp - m), (0, 0)))
    return p


def _vmem_limit(block_bytes):
    """Derived scoped-VMEM budget: every block 2-deep pipelined plus headroom
    for compiler scratch.  Clamped well under the v7x 64 MiB ceiling."""
    return int(min(56 << 20, max(8 << 20, 2 * block_bytes + (4 << 20))))


def _leaky(x):
    return jnp.where(x >= 0, x, LEAK * x)


# --------------------------------------------------------------------------
# Pallas kernels
# --------------------------------------------------------------------------
def _matmul_bias_lrelu_kernel(x_ref, w_ref, b_ref, o_ref):
    """conv1: o = leaky_relu(x @ w + b), f32 accumulate, store compute dtype."""
    y = jnp.dot(x_ref[...], w_ref[...], preferred_element_type=jnp.float32)
    o_ref[...] = _leaky(y + b_ref[...]).astype(o_ref.dtype)


def _affine_lrelu_kernel(y_ref, s_ref, t_ref, o_ref):
    """BN pass 2: o = leaky_relu(y * s + t) with folded batch-norm affine."""
    y = y_ref[...].astype(jnp.float32)
    o_ref[...] = _leaky(y * s_ref[...] + t_ref[...]).astype(o_ref.dtype)


# --------------------------------------------------------------------------
# pallas_call wrappers
# --------------------------------------------------------------------------
def _conv_bias_lrelu(patches, w_mat, bias_row, tm, out_dtype):
    mp, k = patches.shape
    cp = w_mat.shape[1]
    blk = (tm * k * patches.dtype.itemsize
           + k * cp * w_mat.dtype.itemsize
           + cp * 4
           + tm * cp * jnp.dtype(out_dtype).itemsize)
    # NOTE: on v5e, pipeline_mode=pl.Buffered(3) on the patches spec can hide
    # extra DMA latency; kept at the default 2-deep buffering here.
    return pl.pallas_call(
        _matmul_bias_lrelu_kernel,
        out_shape=jax.ShapeDtypeStruct((mp, cp), out_dtype),
        grid=(mp // tm,),
        in_specs=[
            pl.BlockSpec((tm, k), lambda i: (i, 0)),
            pl.BlockSpec((k, cp), lambda i: (0, 0)),
            pl.BlockSpec((1, cp), lambda i: (0, 0)),
        ],
        out_specs=pl.BlockSpec((tm, cp), lambda i: (i, 0)),
        compiler_params=pltpu.CompilerParams(
            dimension_semantics=("parallel",),
            vmem_limit_bytes=_vmem_limit(blk)),
    )(patches, w_mat, bias_row)


def _conv_stats(patches, w_mat, m_true, tm, out_dtype):
    """BN pass 1: y = patches @ w (bias cancels under training-mode BN), plus
    per-tile partial sums and centered sum-of-squared-deviations, combined in
    the wrapper with the parallel (Chan) variance formula."""
    mp, k = patches.shape
    cp = w_mat.shape[1]
    nt = mp // tm

    def kernel(x_ref, w_ref, y_ref, s_ref, ssd_ref):
        i = pl.program_id(0)
        y = jnp.dot(x_ref[...], w_ref[...], preferred_element_type=jnp.float32)
        y_ref[...] = y.astype(y_ref.dtype)
        # Per-tile centered stats.  Zero-padded rows of the last tile are
        # exactly 0 (so they don't bias the sum) and are masked out of the
        # squared-deviation term.
        n_valid = jnp.minimum(tm, m_true - i * tm)
        s = jnp.sum(y, axis=0, keepdims=True)                       # (1, cp)
        mean_t = s * (1.0 / n_valid.astype(jnp.float32))
        rows = jax.lax.broadcasted_iota(jnp.int32, (tm, 1), 0)
        d = jnp.where(rows < n_valid, y - mean_t, 0.0)
        s_ref[...] = s.reshape(1, 1, cp)
        ssd_ref[...] = jnp.sum(d * d, axis=0, keepdims=True).reshape(1, 1, cp)

    blk = (tm * k * patches.dtype.itemsize
           + k * cp * w_mat.dtype.itemsize
           + tm * cp * jnp.dtype(out_dtype).itemsize
           + 2 * cp * 4)

    y, s_p, ssd_p = pl.pallas_call(
        kernel,
        out_shape=(
            jax.ShapeDtypeStruct((mp, cp), out_dtype),
            jax.ShapeDtypeStruct((nt, 1, cp), jnp.float32),
            jax.ShapeDtypeStruct((nt, 1, cp), jnp.float32),
        ),
        grid=(nt,),
        in_specs=[
            pl.BlockSpec((tm, k), lambda i: (i, 0)),
            pl.BlockSpec((k, cp), lambda i: (0, 0)),
        ],
        out_specs=(
            pl.BlockSpec((tm, cp), lambda i: (i, 0)),
            pl.BlockSpec((1, 1, cp), lambda i: (i, 0, 0)),
            pl.BlockSpec((1, 1, cp), lambda i: (i, 0, 0)),
        ),
        compiler_params=pltpu.CompilerParams(
            dimension_semantics=("parallel",),     # independent per-tile outputs
            vmem_limit_bytes=_vmem_limit(blk)),
    )(patches, w_mat)

    # Combine the tiny per-tile partials in plain JAX (two-level centered
    # formula -- numerically robust even when |mean| >> std).
    s_p = s_p[:, 0, :]                                            # (nt, cp)
    ssd_p = ssd_p[:, 0, :]
    counts = jnp.minimum(tm, m_true - jnp.arange(nt) * tm).astype(jnp.float32)
    counts = counts[:, None]                                      # (nt, 1)
    total = jnp.sum(s_p, axis=0, keepdims=True)                   # (1, cp)
    mean = total / m_true
    mean_t = s_p / counts
    ssd = (jnp.sum(ssd_p, axis=0, keepdims=True)
           + jnp.sum(counts * (mean_t - mean) ** 2, axis=0, keepdims=True))
    var = ssd / m_true                                            # biased, as BN
    return y, mean, var


def _affine_lrelu(y, scale_row, shift_row, tm):
    mp, cp = y.shape
    blk = 2 * tm * cp * y.dtype.itemsize + 2 * cp * 4
    return pl.pallas_call(
        _affine_lrelu_kernel,
        out_shape=jax.ShapeDtypeStruct((mp, cp), y.dtype),
        grid=(mp // tm,),
        in_specs=[
            pl.BlockSpec((tm, cp), lambda i: (i, 0)),
            pl.BlockSpec((1, cp), lambda i: (0, 0)),
            pl.BlockSpec((1, cp), lambda i: (0, 0)),
        ],
        out_specs=pl.BlockSpec((tm, cp), lambda i: (i, 0)),
        compiler_params=pltpu.CompilerParams(
            dimension_semantics=("parallel",),
            vmem_limit_bytes=_vmem_limit(blk)),
    )(y, scale_row, shift_row)


# --------------------------------------------------------------------------
# Glue: NHWC im2col, weight repack, layers, full forward
# --------------------------------------------------------------------------
def _im2col_nhwc(x, kh, kw, stride, pad):
    """x: [N,H,W,C] -> ([N*Ho*Wo, kh*kw*C], Ho, Wo); K ordering (kh, kw, c).
    dtype-preserving, so bf16 activations yield bf16 patches directly."""
    n, h, w, c = x.shape
    xp = jnp.pad(x, ((0, 0), (pad, pad), (pad, pad), (0, 0)))
    ho = (h + 2 * pad - kh) // stride + 1
    wo = (w + 2 * pad - kw) // stride + 1
    cols = []
    for i in range(kh):
        for j in range(kw):
            cols.append(xp[:, i:i + stride * ho:stride, j:j + stride * wo:stride, :])
    p = jnp.stack(cols, axis=3)                      # [N, Ho, Wo, kh*kw, C]
    return p.reshape(n * ho * wo, kh * kw * c), ho, wo


def _w_mat_nhwc(w_oihw, c_pad, dtype):
    """OIHW torch weight -> [KH*KW*Cin, C_out padded to c_pad] in compute dtype."""
    o, i, kh, kw = w_oihw.shape
    w = jnp.transpose(w_oihw, (2, 3, 1, 0)).reshape(kh * kw * i, o)
    return jnp.pad(w, ((0, 0), (0, c_pad - o))).astype(dtype)


def _conv_lrelu_layer(x_nhwc, w_oihw, b, dtype):
    n = x_nhwc.shape[0]
    c_out = w_oihw.shape[0]
    cp = _round_up(c_out, _LANE)
    p, ho, wo = _im2col_nhwc(x_nhwc, 4, 4, 2, 1)     # already compute dtype
    m = p.shape[0]
    tm = _choose_tm(m, _TM_SMALL_K)                  # K=16: big row tiles
    p = _pad_rows(p, tm)
    w_mat = _w_mat_nhwc(w_oihw, cp, dtype)
    bias = jnp.pad(b, (0, cp - c_out)).reshape(1, cp).astype(jnp.float32)
    out = _conv_bias_lrelu(p, w_mat, bias, tm, dtype)
    return out[:m, :c_out].reshape(n, ho, wo, c_out)


def _conv_bn_lrelu_layer(x_nhwc, w_oihw, g, bt, dtype):
    # The conv bias cancels exactly under training-mode BatchNorm, so it is
    # not needed here (semantics identical to Conv2d(bias=True) + BN).
    n = x_nhwc.shape[0]
    c_out = w_oihw.shape[0]
    cp = _round_up(c_out, _LANE)
    p, ho, wo = _im2col_nhwc(x_nhwc, 4, 4, 2, 1)
    m = p.shape[0]
    tm = _choose_tm(m, _TM_MATMUL)
    p = _pad_rows(p, tm)
    w_mat = _w_mat_nhwc(w_oihw, cp, dtype)

    # pass 1: tiled conv + per-tile (sum, centered ssd) partials -> mean/var.
    y, mean, var = _conv_stats(p, w_mat, m, tm, dtype)

    # fold batch stats (biased variance, eps=1e-5) + gamma/beta into one
    # per-channel affine.
    inv = jax.lax.rsqrt(var + BN_EPS)
    g_row = jnp.pad(g, (0, cp - c_out)).reshape(1, cp)
    bt_row = jnp.pad(bt, (0, cp - c_out)).reshape(1, cp)
    scale = (g_row * inv).astype(jnp.float32)
    shift = (bt_row - mean * g_row * inv).astype(jnp.float32)

    # pass 2: tiled affine + LeakyReLU (larger tile to amortize step overhead).
    tm2 = _grow_tm(y.shape[0], tm, _TM_ELEMENTWISE)
    out = _affine_lrelu(y, scale, shift, tm2)
    return out[:m, :c_out].reshape(n, ho, wo, c_out)


def _fc_layer(x_nhwc, w_oihw, b, dtype):
    # C_out == 1: a Pallas call here is pure launch overhead with a 1-lane
    # (masked) store, so this stays a plain dot.
    n = x_nhwc.shape[0]
    p, ho, wo = _im2col_nhwc(x_nhwc, 4, 4, 1, 0)     # already compute dtype
    w = jnp.transpose(w_oihw, (2, 3, 1, 0)).reshape(-1, w_oihw.shape[0]).astype(dtype)
    out = jnp.dot(p, w, preferred_element_type=jnp.float32) + b.reshape(1, -1)
    return out.reshape(n, ho, wo, w_oihw.shape[0])


def d1_forward(params, x_nchw, compute_dtype=jnp.bfloat16):
    # single NCHW -> NHWC layout change + single cast to the compute dtype at
    # the boundary; everything downstream stays channels-last compute-dtype so
    # Pallas outputs feed the next im2col directly with no extra copies.
    x = jnp.transpose(x_nchw, (0, 2, 3, 1)).astype(compute_dtype)
    x = _conv_lrelu_layer(x, params["w1"], params["b1"], compute_dtype)
    x = _conv_bn_lrelu_layer(x, params["w2"], params["g2"], params["bt2"], compute_dtype)
    x = _conv_bn_lrelu_layer(x, params["w3"], params["g3"], params["bt3"], compute_dtype)
    out = _fc_layer(x, params["wf"], params["bf"], compute_dtype)   # [N,1,1,1]
    return jnp.squeeze(out)


# --------------------------------------------------------------------------
# Parameter init
# --------------------------------------------------------------------------
def init_params(key, depth=8):
    ks = jax.random.split(key, 12)

    def conv_w(k, cout, cin):
        return jax.random.normal(k, (cout, cin, 4, 4), jnp.float32) * 0.05

    return {
        "w1": conv_w(ks[0], depth, 1),
        "b1": jax.random.normal(ks[1], (depth,), jnp.float32) * 0.01,
        "w2": conv_w(ks[2], depth * 2, depth),
        "b2": jax.random.normal(ks[3], (depth * 2,), jnp.float32) * 0.01,
        "g2": 1.0 + 0.1 * jax.random.normal(ks[4], (depth * 2,), jnp.float32),
        "bt2": 0.1 * jax.random.normal(ks[5], (depth * 2,), jnp.float32),
        "w3": conv_w(ks[6], depth * 4, depth * 2),
        "b3": jax.random.normal(ks[7], (depth * 4,), jnp.float32) * 0.01,
        "g3": 1.0 + 0.1 * jax.random.normal(ks[8], (depth * 4,), jnp.float32),
        "bt3": 0.1 * jax.random.normal(ks[9], (depth * 4,), jnp.float32),
        "wf": conv_w(ks[10], 1, depth * 4),
        "bf": jax.random.normal(ks[11], (1,), jnp.float32) * 0.01,
    }


# --------------------------------------------------------------------------
# Pure-JAX reference (torch semantics).  mirror_dtype rounds conv inputs and
# weights to the compute dtype so the bf16 Pallas path can be checked tightly.
# --------------------------------------------------------------------------
def _maybe_round(a, dtype):
    if dtype is None:
        return a
    return a.astype(dtype).astype(jnp.float32)


def d1_reference(params, x, mirror_dtype=None):
    def conv(h, w, b, stride, pad):
        y = jax.lax.conv_general_dilated(
            _maybe_round(h, mirror_dtype), _maybe_round(w, mirror_dtype),
            (stride, stride), [(pad, pad), (pad, pad)],
            dimension_numbers=("NCHW", "OIHW", "NCHW"))
        return y + b.reshape(1, -1, 1, 1)

    def bn_lrelu(y, g, bt):
        mean = y.mean(axis=(0, 2, 3), keepdims=True)
        var = ((y - mean) ** 2).mean(axis=(0, 2, 3), keepdims=True)
        z = (y - mean) * jax.lax.rsqrt(var + BN_EPS) * g.reshape(1, -1, 1, 1) \
            + bt.reshape(1, -1, 1, 1)
        return jnp.where(z >= 0, z, LEAK * z)

    y = conv(x, params["w1"], params["b1"], 2, 1)
    y = jnp.where(y >= 0, y, LEAK * y)
    y = bn_lrelu(conv(y, params["w2"], params["b2"], 2, 1), params["g2"], params["bt2"])
    y = bn_lrelu(conv(y, params["w3"], params["b3"], 2, 1), params["g3"], params["bt3"])
    y = conv(y, params["wf"], params["bf"], 1, 0)
    return jnp.squeeze(y)


if __name__ == "__main__":
    key = jax.random.PRNGKey(0)
    pkey, xkey = jax.random.split(key)
    depth = 8                                              # stand-in for depth=64
    params = init_params(pkey, depth=depth)
    x = jax.random.normal(xkey, (2, 1, 32, 32), jnp.float32)   # NCHW, 1 channel

    fwd = jax.jit(d1_forward, static_argnames=("compute_dtype",))

    # f32 path: strict check of the kernel logic against the pure-JAX reference
    out_f32 = jax.block_until_ready(fwd(params, x, compute_dtype=jnp.float32))
    ref_f32 = jax.block_until_ready(d1_reference(params, x, mirror_dtype=None))
    assert out_f32.shape == (2,), out_f32.shape
    assert jnp.allclose(out_f32, ref_f32, atol=1e-4, rtol=1e-4), (out_f32, ref_f32)

    # bf16 MXU path (production setting): loose check vs rounded reference.
    # Tolerance covers the bf16 storage of the intermediate y/activations.
    out_bf16 = jax.block_until_ready(fwd(params, x, compute_dtype=jnp.bfloat16))
    ref_bf16 = jax.block_until_ready(d1_reference(params, x, mirror_dtype=jnp.bfloat16))
    assert out_bf16.shape == (2,), out_bf16.shape
    assert jnp.allclose(out_bf16, ref_bf16, atol=3e-2, rtol=3e-2), (out_bf16, ref_bf16)

    print("KERNEL_OK")
</pallas_src>

<mosaic_0001>
module attributes {stable_mosaic.version = 11 : i64} {
  func.func @_matmul_bias_lrelu_kernel(%arg0: i32, %arg1: memref<256x16xf32, #tpu.memory_space<vmem>>, %arg2: memref<16x128xf32, #tpu.memory_space<vmem>>, %arg3: memref<1x128xf32, #tpu.memory_space<vmem>>, %arg4: memref<256x128xf32, #tpu.memory_space<vmem>>) attributes {dimension_semantics = [#tpu.dimension_semantics<parallel>], iteration_bounds = array<i64: 2>, scalar_prefetch = 0 : i64, scratch_operands = 0 : i64, tpu.core_type = #tpu.core_type<tc>, window_params = [{transform_indices = @transform_0, window_bounds = array<i64: 256, 16>}, {pipeline_mode = #tpu.pipeline_mode<synchronous>, transform_indices = @transform_1, window_bounds = array<i64: 16, 128>}, {pipeline_mode = #tpu.pipeline_mode<synchronous>, transform_indices = @transform_2, window_bounds = array<i64: 1, 128>}, {transform_indices = @transform_3, window_bounds = array<i64: 256, 128>}]} {
    %c0 = arith.constant 0 : index
    %c0_0 = arith.constant 0 : index
    %0 = vector.load %arg1[%c0, %c0_0] : memref<256x16xf32, #tpu.memory_space<vmem>>, vector<256x16xf32>
    %c0_1 = arith.constant 0 : index
    %c0_2 = arith.constant 0 : index
    %1 = vector.load %arg2[%c0_1, %c0_2] : memref<16x128xf32, #tpu.memory_space<vmem>>, vector<16x128xf32>
    %cst = arith.constant dense<0.000000e+00> : vector<256x128xf32>
    %2 = tpu.matmul %0, %1, %cst {dimension_numbers = #tpu.dot_dimension_numbers<[1], [0], [0], [1], [0, 0, 1, 1], [], []>} : vector<256x16xf32>, vector<16x128xf32>, vector<256x128xf32> -> vector<256x128xf32>
    %c0_3 = arith.constant 0 : index
    %c0_4 = arith.constant 0 : index
    %3 = vector.load %arg3[%c0_3, %c0_4] : memref<1x128xf32, #tpu.memory_space<vmem>>, vector<1x128xf32>
    %4 = vector.broadcast %3 : vector<1x128xf32> to vector<256x128xf32>
    %5 = arith.addf %2, %4 : vector<256x128xf32>
    %cst_5 = arith.constant 0.000000e+00 : f32
    %6 = vector.broadcast %cst_5 : f32 to vector<256x128xf32>
    %7 = arith.cmpf oge, %5, %6 : vector<256x128xf32>
    %cst_6 = arith.constant 5.000000e-02 : f32
    %8 = vector.broadcast %cst_6 : f32 to vector<256x128xf32>
    %9 = arith.mulf %8, %5 : vector<256x128xf32>
    %10 = arith.select %7, %5, %9 : vector<256x128xi1>, vector<256x128xf32>
    %c0_7 = arith.constant 0 : index
    %c0_8 = arith.constant 0 : index
    %11 = vector.load %arg4[%c0_7, %c0_8] : memref<256x128xf32, #tpu.memory_space<vmem>>, vector<256x128xf32>
    tpu.vector_store %arg4[%c0_7, %c0_8], %10 {strides = array<i32>} : memref<256x128xf32, #tpu.memory_space<vmem>>, vector<256x128xf32>,
    return
  }
  func.func @transform_0(%arg0: i32) -> (i32, i32) {
    %c0_i32 = arith.constant 0 : i32
    %c0_i32_0 = arith.constant 0 : i32
    return %arg0, %c0_i32 : i32, i32
  }
  func.func @transform_1(%arg0: i32) -> (i32, i32) {
    %c0_i32 = arith.constant 0 : i32
    %c0_i32_0 = arith.constant 0 : i32
    %c0_i32_1 = arith.constant 0 : i32
    return %c0_i32, %c0_i32_0 : i32, i32
  }
  func.func @transform_2(%arg0: i32) -> (i32, i32) {
    %c0_i32 = arith.constant 0 : i32
    %c0_i32_0 = arith.constant 0 : i32
    %c0_i32_1 = arith.constant 0 : i32
    return %c0_i32, %c0_i32_0 : i32, i32
  }
  func.func @transform_3(%arg0: i32) -> (i32, i32) {
    %c0_i32 = arith.constant 0 : i32
    %c0_i32_0 = arith.constant 0 : i32
    return %arg0, %c0_i32 : i32, i32
  }
}

module attributes {stable_mosaic.version = 11 : i64} {
  func.func @kernel(%arg0: i32, %arg1: memref<64x128xf32, #tpu.memory_space<vmem>>, %arg2: memref<128x128xf32, #tpu.memory_space<vmem>>, %arg3: memref<64x128xf32, #tpu.memory_space<vmem>>, %arg4: memref<1x1x128xf32, #tpu.memory_space<vmem>>, %arg5: memref<1x1x128xf32, #tpu.memory_space<vmem>>) attributes {dimension_semantics = [#tpu.dimension_semantics<parallel>], iteration_bounds = array<i64: 2>, scalar_prefetch = 0 : i64, scratch_operands = 0 : i64, tpu.core_type = #tpu.core_type<tc>, window_params = [{transform_indices = @transform_0, window_bounds = array<i64: 64, 128>}, {pipeline_mode = #tpu.pipeline_mode<synchronous>, transform_indices = @transform_1, window_bounds = array<i64: 128, 128>}, {transform_indices = @transform_2, window_bounds = array<i64: 64, 128>}, {transform_indices = @transform_3, window_bounds = array<i64: 1, 1, 128>}, {transform_indices = @transform_4, window_bounds = array<i64: 1, 1, 128>}]} {
    %c0 = arith.constant 0 : index
    %c0_0 = arith.constant 0 : index
    %0 = vector.load %arg1[%c0, %c0_0] : memref<64x128xf32, #tpu.memory_space<vmem>>, vector<64x128xf32>
    %c0_1 = arith.constant 0 : index
    %c0_2 = arith.constant 0 : index
    %1 = vector.load %arg2[%c0_1, %c0_2] : memref<128x128xf32, #tpu.memory_space<vmem>>, vector<128x128xf32>
    %cst = arith.constant dense<0.000000e+00> : vector<64x128xf32>
    %2 = tpu.matmul %0, %1, %cst {dimension_numbers = #tpu.dot_dimension_numbers<[1], [0], [0], [1], [0, 0, 1, 1], [], []>} : vector<64x128xf32>, vector<128x128xf32>, vector<64x128xf32> -> vector<64x128xf32>
    %c0_3 = arith.constant 0 : index
    %c0_4 = arith.constant 0 : index
    %3 = vector.load %arg3[%c0_3, %c0_4] : memref<64x128xf32, #tpu.memory_space<vmem>>, vector<64x128xf32>
    tpu.vector_store %arg3[%c0_3, %c0_4], %2 {strides = array<i32>} : memref<64x128xf32, #tpu.memory_space<vmem>>, vector<64x128xf32>,
    %c64_i32 = arith.constant 64 : i32
    %4 = arith.muli %arg0, %c64_i32 : i32
    %c128_i32 = arith.constant 128 : i32
    %5 = arith.subi %c128_i32, %4 : i32
    %c64_i32_5 = arith.constant 64 : i32
    %6 = arith.minsi %c64_i32_5, %5 : i32
    %cst_6 = arith.constant dense<0.000000e+00> : vector<128xf32>
    %7 = vector.multi_reduction <add>, %2, %cst_6 [0] : vector<64x128xf32> to vector<128xf32>
    %8 = vector.shape_cast %7 : vector<128xf32> to vector<1x128xf32>
    %9 = arith.sitofp %6 : i32 to f32
    %cst_7 = arith.constant 1.000000e+00 : f32
    %10 = arith.divf %cst_7, %9 : f32
    %11 = vector.broadcast %10 : f32 to vector<1x128xf32>
    %12 = arith.mulf %8, %11 : vector<1x128xf32>
    %13 = tpu.iota {dimensions = array<i32: 0>} : vector<64x1xi32>
    %14 = vector.broadcast %6 : i32 to vector<64x1xi32>
    %15 = arith.cmpi slt, %13, %14 : vector<64x1xi32>
    %16 = vector.broadcast %12 : vector<1x128xf32> to vector<64x128xf32>
    %17 = arith.subf %2, %16 : vector<64x128xf32>
    %cst_8 = arith.constant 0.000000e+00 : f32
    %18 = vector.shape_cast %15 : vector<64x1xi1> to vector<64x1xi1>
    %19 = vector.broadcast %18 : vector<64x1xi1> to vector<64x128xi1>
    %20 = vector.broadcast %cst_8 : f32 to vector<64x128xf32>
    %21 = arith.select %19, %17, %20 : vector<64x128xi1>, vector<64x128xf32>
    %22 = vector.shape_cast %8 : vector<1x128xf32> to vector<1x1x128xf32>
    %c0_9 = arith.constant 0 : index
    %c0_10 = arith.constant 0 : index
    %c0_11 = arith.constant 0 : index
    %23 = vector.load %arg4[%c0_9, %c0_10, %c0_11] : memref<1x1x128xf32, #tpu.memory_space<vmem>>, vector<1x1x128xf32>
    tpu.vector_store %arg4[%c0_9, %c0_10, %c0_11], %22 {strides = array<i32>} : memref<1x1x128xf32, #tpu.memory_space<vmem>>, vector<1x1x128xf32>,
    %24 = arith.mulf %21, %21 : vector<64x128xf32>
    %cst_12 = arith.constant dense<0.000000e+00> : vector<128xf32>
    %25 = vector.multi_reduction <add>, %24, %cst_12 [0] : vector<64x128xf32> to vector<128xf32>
    %26 = vector.shape_cast %25 : vector<128xf32> to vector<1x128xf32>
    %27 = vector.shape_cast %26 : vector<1x128xf32> to vector<1x1x128xf32>
    %c0_13 = arith.constant 0 : index
    %c0_14 = arith.constant 0 : index
    %c0_15 = arith.constant 0 : index
    %28 = vector.load %arg5[%c0_13, %c0_14, %c0_15] : memref<1x1x128xf32, #tpu.memory_space<vmem>>, vector<1x1x128xf32>
    tpu.vector_store %arg5[%c0_13, %c0_14, %c0_15], %27 {strides = array<i32>} : memref<1x1x128xf32, #tpu.memory_space<vmem>>, vector<1x1x128xf32>,
    return
  }
  func.func @transform_0(%arg0: i32) -> (i32, i32) {
    %c0_i32 = arith.constant 0 : i32
    %c0_i32_0 = arith.constant 0 : i32
    return %arg0, %c0_i32 : i32, i32
  }
  func.func @transform_1(%arg0: i32) -> (i32, i32) {
    %c0_i32 = arith.constant 0 : i32
    %c0_i32_0 = arith.constant 0 : i32
    %c0_i32_1 = arith.constant 0 : i32
    return %c0_i32, %c0_i32_0 : i32, i32
  }
  func.func @transform_2(%arg0: i32) -> (i32, i32) {
    %c0_i32 = arith.constant 0 : i32
    %c0_i32_0 = arith.constant 0 : i32
    return %arg0, %c0_i32 : i32, i32
  }
  func.func @transform_3(%arg0: i32) -> (i32, i32, i32) {
    %c0_i32 = arith.constant 0 : i32
    %c0_i32_0 = arith.constant 0 : i32
    %c0_i32_1 = arith.constant 0 : i32
    return %arg0, %c0_i32, %c0_i32_0 : i32, i32, i32
  }
  func.func @transform_4(%arg0: i32) -> (i32, i32, i32) {
    %c0_i32 = arith.constant 0 : i32
    %c0_i32_0 = arith.constant 0 : i32
    %c0_i32_1 = arith.constant 0 : i32
    return %arg0, %c0_i32, %c0_i32_0 : i32, i32, i32
  }
}

module attributes {stable_mosaic.version = 11 : i64} {
  func.func @_affine_lrelu_kernel(%arg0: i32, %arg1: memref<128x128xf32, #tpu.memory_space<vmem>>, %arg2: memref<1x128xf32, #tpu.memory_space<vmem>>, %arg3: memref<1x128xf32, #tpu.memory_space<vmem>>, %arg4: memref<128x128xf32, #tpu.memory_space<vmem>>) attributes {dimension_semantics = [#tpu.dimension_semantics<parallel>], iteration_bounds = array<i64: 1>, scalar_prefetch = 0 : i64, scratch_operands = 0 : i64, tpu.core_type = #tpu.core_type<tc>, window_params = [{transform_indices = @transform_0, window_bounds = array<i64: 128, 128>}, {pipeline_mode = #tpu.pipeline_mode<synchronous>, transform_indices = @transform_1, window_bounds = array<i64: 1, 128>}, {pipeline_mode = #tpu.pipeline_mode<synchronous>, transform_indices = @transform_2, window_bounds = array<i64: 1, 128>}, {transform_indices = @transform_3, window_bounds = array<i64: 128, 128>}]} {
    %c0 = arith.constant 0 : index
    %c0_0 = arith.constant 0 : index
    %0 = vector.load %arg1[%c0, %c0_0] : memref<128x128xf32, #tpu.memory_space<vmem>>, vector<128x128xf32>
    %c0_1 = arith.constant 0 : index
    %c0_2 = arith.constant 0 : index
    %1 = vector.load %arg2[%c0_1, %c0_2] : memref<1x128xf32, #tpu.memory_space<vmem>>, vector<1x128xf32>
    %2 = vector.broadcast %1 : vector<1x128xf32> to vector<128x128xf32>
    %3 = arith.mulf %0, %2 : vector<128x128xf32>
    %c0_3 = arith.constant 0 : index
    %c0_4 = arith.constant 0 : index
    %4 = vector.load %arg3[%c0_3, %c0_4] : memref<1x128xf32, #tpu.memory_space<vmem>>, vector<1x128xf32>
    %5 = vector.broadcast %4 : vector<1x128xf32> to vector<128x128xf32>
    %6 = arith.addf %3, %5 : vector<128x128xf32>
    %cst = arith.constant 0.000000e+00 : f32
    %7 = vector.broadcast %cst : f32 to vector<128x128xf32>
    %8 = arith.cmpf oge, %6, %7 : vector<128x128xf32>
    %cst_5 = arith.constant 5.000000e-02 : f32
    %9 = vector.broadcast %cst_5 : f32 to vector<128x128xf32>
    %10 = arith.mulf %9, %6 : vector<128x128xf32>
    %11 = arith.select %8, %6, %10 : vector<128x128xi1>, vector<128x128xf32>
    %c0_6 = arith.constant 0 : index
    %c0_7 = arith.constant 0 : index
    %12 = vector.load %arg4[%c0_6, %c0_7] : memref<128x128xf32, #tpu.memory_space<vmem>>, vector<128x128xf32>
    tpu.vector_store %arg4[%c0_6, %c0_7], %11 {strides = array<i32>} : memref<128x128xf32, #tpu.memory_space<vmem>>, vector<128x128xf32>,
    return
  }
  func.func @transform_0(%arg0: i32) -> (i32, i32) {
    %c0_i32 = arith.constant 0 : i32
    %c0_i32_0 = arith.constant 0 : i32
    return %arg0, %c0_i32 : i32, i32
  }
  func.func @transform_1(%arg0: i32) -> (i32, i32) {
    %c0_i32 = arith.constant 0 : i32
    %c0_i32_0 = arith.constant 0 : i32
    %c0_i32_1 = arith.constant 0 : i32
    return %c0_i32, %c0_i32_0 : i32, i32
  }
  func.func @transform_2(%arg0: i32) -> (i32, i32) {
    %c0_i32 = arith.constant 0 : i32
    %c0_i32_0 = arith.constant 0 : i32
    %c0_i32_1 = arith.constant 0 : i32
    return %c0_i32, %c0_i32_0 : i32, i32
  }
  func.func @transform_3(%arg0: i32) -> (i32, i32) {
    %c0_i32 = arith.constant 0 : i32
    %c0_i32_0 = arith.constant 0 : i32
    return %arg0, %c0_i32 : i32, i32
  }
}

module attributes {stable_mosaic.version = 11 : i64} {
  func.func @kernel(%arg0: i32, %arg1: memref<16x256xf32, #tpu.memory_space<vmem>>, %arg2: memref<256x128xf32, #tpu.memory_space<vmem>>, %arg3: memref<16x128xf32, #tpu.memory_space<vmem>>, %arg4: memref<1x1x128xf32, #tpu.memory_space<vmem>>, %arg5: memref<1x1x128xf32, #tpu.memory_space<vmem>>) attributes {dimension_semantics = [#tpu.dimension_semantics<parallel>], iteration_bounds = array<i64: 2>, scalar_prefetch = 0 : i64, scratch_operands = 0 : i64, tpu.core_type = #tpu.core_type<tc>, window_params = [{transform_indices = @transform_0, window_bounds = array<i64: 16, 256>}, {pipeline_mode = #tpu.pipeline_mode<synchronous>, transform_indices = @transform_1, window_bounds = array<i64: 256, 128>}, {transform_indices = @transform_2, window_bounds = array<i64: 16, 128>}, {transform_indices = @transform_3, window_bounds = array<i64: 1, 1, 128>}, {transform_indices = @transform_4, window_bounds = array<i64: 1, 1, 128>}]} {
    %c0 = arith.constant 0 : index
    %c0_0 = arith.constant 0 : index
    %0 = vector.load %arg1[%c0, %c0_0] : memref<16x256xf32, #tpu.memory_space<vmem>>, vector<16x256xf32>
    %c0_1 = arith.constant 0 : index
    %c0_2 = arith.constant 0 : index
    %1 = vector.load %arg2[%c0_1, %c0_2] : memref<256x128xf32, #tpu.memory_space<vmem>>, vector<256x128xf32>
    %cst = arith.constant dense<0.000000e+00> : vector<16x128xf32>
    %2 = tpu.matmul %0, %1, %cst {dimension_numbers = #tpu.dot_dimension_numbers<[1], [0], [0], [1], [0, 0, 1, 1], [], []>} : vector<16x256xf32>, vector<256x128xf32>, vector<16x128xf32> -> vector<16x128xf32>
    %c0_3 = arith.constant 0 : index
    %c0_4 = arith.constant 0 : index
    %3 = vector.load %arg3[%c0_3, %c0_4] : memref<16x128xf32, #tpu.memory_space<vmem>>, vector<16x128xf32>
    tpu.vector_store %arg3[%c0_3, %c0_4], %2 {strides = array<i32>} : memref<16x128xf32, #tpu.memory_space<vmem>>, vector<16x128xf32>,
    %c16_i32 = arith.constant 16 : i32
    %4 = arith.muli %arg0, %c16_i32 : i32
    %c32_i32 = arith.constant 32 : i32
    %5 = arith.subi %c32_i32, %4 : i32
    %c16_i32_5 = arith.constant 16 : i32
    %6 = arith.minsi %c16_i32_5, %5 : i32
    %cst_6 = arith.constant dense<0.000000e+00> : vector<128xf32>
    %7 = vector.multi_reduction <add>, %2, %cst_6 [0] : vector<16x128xf32> to vector<128xf32>
    %8 = vector.shape_cast %7 : vector<128xf32> to vector<1x128xf32>
    %9 = arith.sitofp %6 : i32 to f32
    %cst_7 = arith.constant 1.000000e+00 : f32
    %10 = arith.divf %cst_7, %9 : f32
    %11 = vector.broadcast %10 : f32 to vector<1x128xf32>
    %12 = arith.mulf %8, %11 : vector<1x128xf32>
    %13 = tpu.iota {dimensions = array<i32: 0>} : vector<16x1xi32>
    %14 = vector.broadcast %6 : i32 to vector<16x1xi32>
    %15 = arith.cmpi slt, %13, %14 : vector<16x1xi32>
    %16 = vector.broadcast %12 : vector<1x128xf32> to vector<16x128xf32>
    %17 = arith.subf %2, %16 : vector<16x128xf32>
    %cst_8 = arith.constant 0.000000e+00 : f32
    %18 = vector.shape_cast %15 : vector<16x1xi1> to vector<16x1xi1>
    %19 = vector.broadcast %18 : vector<16x1xi1> to vector<16x128xi1>
    %20 = vector.broadcast %cst_8 : f32 to vector<16x128xf32>
    %21 = arith.select %19, %17, %20 : vector<16x128xi1>, vector<16x128xf32>
    %22 = vector.shape_cast %8 : vector<1x128xf32> to vector<1x1x128xf32>
    %c0_9 = arith.constant 0 : index
    %c0_10 = arith.constant 0 : index
    %c0_11 = arith.constant 0 : index
    %23 = vector.load %arg4[%c0_9, %c0_10, %c0_11] : memref<1x1x128xf32, #tpu.memory_space<vmem>>, vector<1x1x128xf32>
    tpu.vector_store %arg4[%c0_9, %c0_10, %c0_11], %22 {strides = array<i32>} : memref<1x1x128xf32, #tpu.memory_space<vmem>>, vector<1x1x128xf32>,
    %24 = arith.mulf %21, %21 : vector<16x128xf32>
    %cst_12 = arith.constant dense<0.000000e+00> : vector<128xf32>
    %25 = vector.multi_reduction <add>, %24, %cst_12 [0] : vector<16x128xf32> to vector<128xf32>
    %26 = vector.shape_cast %25 : vector<128xf32> to vector<1x128xf32>
    %27 = vector.shape_cast %26 : vector<1x128xf32> to vector<1x1x128xf32>
    %c0_13 = arith.constant 0 : index
    %c0_14 = arith.constant 0 : index
    %c0_15 = arith.constant 0 : index
    %28 = vector.load %arg5[%c0_13, %c0_14, %c0_15] : memref<1x1x128xf32, #tpu.memory_space<vmem>>, vector<1x1x128xf32>
    tpu.vector_store %arg5[%c0_13, %c0_14, %c0_15], %27 {strides = array<i32>} : memref<1x1x128xf32, #tpu.memory_space<vmem>>, vector<1x1x128xf32>,
    return
  }
  func.func @transform_0(%arg0: i32) -> (i32, i32) {
    %c0_i32 = arith.constant 0 : i32
    %c0_i32_0 = arith.constant 0 : i32
    return %arg0, %c0_i32 : i32, i32
  }
  func.func @transform_1(%arg0: i32) -> (i32, i32) {
    %c0_i32 = arith.constant 0 : i32
    %c0_i32_0 = arith.constant 0 : i32
    %c0_i32_1 = arith.constant 0 : i32
    return %c0_i32, %c0_i32_0 : i32, i32
  }
  func.func @transform_2(%arg0: i32) -> (i32, i32) {
    %c0_i32 = arith.constant 0 : i32
    %c0_i32_0 = arith.constant 0 : i32
    return %arg0, %c0_i32 : i32, i32
  }
  func.func @transform_3(%arg0: i32) -> (i32, i32, i32) {
    %c0_i32 = arith.constant 0 : i32
    %c0_i32_0 = arith.constant 0 : i32
    %c0_i32_1 = arith.constant 0 : i32
    return %arg0, %c0_i32, %c0_i32_0 : i32, i32, i32
  }
  func.func @transform_4(%arg0: i32) -> (i32, i32, i32) {
    %c0_i32 = arith.constant 0 : i32
    %c0_i32_0 = arith.constant 0 : i32
    %c0_i32_1 = arith.constant 0 : i32
    return %arg0, %c0_i32, %c0_i32_0 : i32, i32, i32
  }
}

module attributes {stable_mosaic.version = 11 : i64} {
  func.func @_affine_lrelu_kernel(%arg0: i32, %arg1: memref<32x128xf32, #tpu.memory_space<vmem>>, %arg2: memref<1x128xf32, #tpu.memory_space<vmem>>, %arg3: memref<1x128xf32, #tpu.memory_space<vmem>>, %arg4: memref<32x128xf32, #tpu.memory_space<vmem>>) attributes {dimension_semantics = [#tpu.dimension_semantics<parallel>], iteration_bounds = array<i64: 1>, scalar_prefetch = 0 : i64, scratch_operands = 0 : i64, tpu.core_type = #tpu.core_type<tc>, window_params = [{transform_indices = @transform_0, window_bounds = array<i64: 32, 128>}, {pipeline_mode = #tpu.pipeline_mode<synchronous>, transform_indices = @transform_1, window_bounds = array<i64: 1, 128>}, {pipeline_mode = #tpu.pipeline_mode<synchronous>, transform_indices = @transform_2, window_bounds = array<i64: 1, 128>}, {transform_indices = @transform_3, window_bounds = array<i64: 32, 128>}]} {
    %c0 = arith.constant 0 : index
    %c0_0 = arith.constant 0 : index
    %0 = vector.load %arg1[%c0, %c0_0] : memref<32x128xf32, #tpu.memory_space<vmem>>, vector<32x128xf32>
    %c0_1 = arith.constant 0 : index
    %c0_2 = arith.constant 0 : index
    %1 = vector.load %arg2[%c0_1, %c0_2] : memref<1x128xf32, #tpu.memory_space<vmem>>, vector<1x128xf32>
    %2 = vector.broadcast %1 : vector<1x128xf32> to vector<32x128xf32>
    %3 = arith.mulf %0, %2 : vector<32x128xf32>
    %c0_3 = arith.constant 0 : index
    %c0_4 = arith.constant 0 : index
    %4 = vector.load %arg3[%c0_3, %c0_4] : memref<1x128xf32, #tpu.memory_space<vmem>>, vector<1x128xf32>
    %5 = vector.broadcast %4 : vector<1x128xf32> to vector<32x128xf32>
    %6 = arith.addf %3, %5 : vector<32x128xf32>
    %cst = arith.constant 0.000000e+00 : f32
    %7 = vector.broadcast %cst : f32 to vector<32x128xf32>
    %8 = arith.cmpf oge, %6, %7 : vector<32x128xf32>
    %cst_5 = arith.constant 5.000000e-02 : f32
    %9 = vector.broadcast %cst_5 : f32 to vector<32x128xf32>
    %10 = arith.mulf %9, %6 : vector<32x128xf32>
    %11 = arith.select %8, %6, %10 : vector<32x128xi1>, vector<32x128xf32>
    %c0_6 = arith.constant 0 : index
    %c0_7 = arith.constant 0 : index
    %12 = vector.load %arg4[%c0_6, %c0_7] : memref<32x128xf32, #tpu.memory_space<vmem>>, vector<32x128xf32>
    tpu.vector_store %arg4[%c0_6, %c0_7], %11 {strides = array<i32>} : memref<32x128xf32, #tpu.memory_space<vmem>>, vector<32x128xf32>,
    return
  }
  func.func @transform_0(%arg0: i32) -> (i32, i32) {
    %c0_i32 = arith.constant 0 : i32
    %c0_i32_0 = arith.constant 0 : i32
    return %arg0, %c0_i32 : i32, i32
  }
  func.func @transform_1(%arg0: i32) -> (i32, i32) {
    %c0_i32 = arith.constant 0 : i32
    %c0_i32_0 = arith.constant 0 : i32
    %c0_i32_1 = arith.constant 0 : i32
    return %c0_i32, %c0_i32_0 : i32, i32
  }
  func.func @transform_2(%arg0: i32) -> (i32, i32) {
    %c0_i32 = arith.constant 0 : i32
    %c0_i32_0 = arith.constant 0 : i32
    %c0_i32_1 = arith.constant 0 : i32
    return %c0_i32, %c0_i32_0 : i32, i32
  }
  func.func @transform_3(%arg0: i32) -> (i32, i32) {
    %c0_i32 = arith.constant 0 : i32
    %c0_i32_0 = arith.constant 0 : i32
    return %arg0, %c0_i32 : i32, i32
  }
}

</mosaic_0001>

<llo_original>
// kernel: d1_forward.5
$region0: #{d1_forward.5}
  #allocation0 [shape = 'u32[]', space=smem, size = 0x4, offset = 0x4, fixed_abs, tag = 'smem constant byte address 0x4 - core index']
  #allocation1 [shape = 'u32[144,128]{1,0:T(1,128)}', space=vmem, size = 0x12000, scoped, tag = 'internal scratch']
  %s0 = inlined_call_operand.vmem [shape: f32[512,16], index: 0, kind: input, shape index: {}]
  %s1 = inlined_call_operand.vmem [shape: f32[16,128], index: 1, kind: input, shape index: {}]
  %s2 = inlined_call_operand.vmem [shape: f32[1,128], index: 2, kind: input, shape index: {}]
  %s3 = inlined_call_operand.vmem [shape: f32[512,128], index: 3, kind: output, shape index: {}]
  %s4 = sld [smem:[#allocation0]]
  $region45: #{d1_forward.5} parent=0
    _
  %s6 = ssub.s32 1, %s4
  %s7 = scalar_select 0, %s6, %s4
  loop: start=0, step=1, limit=4
  $region2: #{d1_forward.5} parent=0 // loop_pre_header
    _
  $region3: #{d1_forward.5} parent=0 // loop_header
    %s9 = sphi 0, %s13
    %p10 = scmp.ge.s32.totalorder %s9, 4
    %s19 = sphi 0, %s21
    %s22 = sphi 0, %s19
    %s23 = sphi 0, %s22
    %s39 = sphi 0, %s23
    %s43 = sphi 0, %s43
    %s45 = sphi 0, %s43
    %s46 = sphi 0, %s45
    %s60 = sphi 0, %s46
    %s64 = sphi 0, %s64
    %s66 = sphi 0, %s64
    %s67 = sphi 0, %s66
    %s81 = sphi 0, %s67
    %s87 = sphi 0, %s89
    %s90 = sphi 0, %s87
    %s91 = sphi 0, %s90
    %s107 = sphi 0, %s91
  $region4: #{d1_forward.5} parent=0 // loop_header_branch
    %12 = sbr.rel (%p10) target = $region8
  $region5: #{d1_forward.5} parent=0 // loop_body
    %s14 = ssub.s32 %s9, 1
    %s15 = ssub.s32 %s9, 2
    %s16 = sadd.s32 %s9, 1
    %s17 = ssub.s32 %s9, %s16
    %p18 = scmp.eq.s32.totalorder %s17, 0
    %s20 = sadd.s32 %s19, 1
    %s21 = scalar_select %p18, %s19, %s20
    %p24 = pneg %p18
    %p25 = scmp.eq.s32.totalorder %s9, 1
    %p26 = por %p24, %p25
    %p27 = scmp.ne.s32.totalorder %s19, %s22
    %p28 = scmp.eq.s32.totalorder %s9, 0
    %p29 = por %p27, %p28
    %p30 = scmp.ne.s32.totalorder %s19, %s22
    %p31 = scmp.eq.s32.totalorder %s14, 1
    %p32 = por %p30, %p31
    %p33 = scmp.ne.s32.totalorder %s22, %s23
    %p34 = scmp.eq.s32.totalorder %s14, 0
    %p35 = por %p33, %p34
    %p36 = scmp.ne.s32.totalorder %s22, %s23
    %p37 = scmp.eq.s32.totalorder %s15, 1
    %p38 = por %p36, %p37
    %p40 = scmp.ne.s32.totalorder %s23, %s39
    %p41 = scmp.eq.s32.totalorder %s15, 0
    %p42 = por %p40, %p41
    %s44 = sadd.s32 %s43, 1
    %p47 = scmp.eq.s32.totalorder %s9, 1
    %p48 = scmp.ne.s32.totalorder %s43, %s45
    %p49 = scmp.eq.s32.totalorder %s9, 0
    %p50 = por %p48, %p49
    %p51 = scmp.ne.s32.totalorder %s43, %s45
    %p52 = scmp.eq.s32.totalorder %s14, 1
    %p53 = por %p51, %p52
    %p54 = scmp.ne.s32.totalorder %s45, %s46
    %p55 = scmp.eq.s32.totalorder %s14, 0
    %p56 = por %p54, %p55
    %p57 = scmp.ne.s32.totalorder %s45, %s46
    %p58 = scmp.eq.s32.totalorder %s15, 1
    %p59 = por %p57, %p58
    %p61 = scmp.ne.s32.totalorder %s46, %s60
    %p62 = scmp.eq.s32.totalorder %s15, 0
    %p63 = por %p61, %p62
    %s65 = sadd.s32 %s64, 1
    %p68 = scmp.eq.s32.totalorder %s9, 1
    %p69 = scmp.ne.s32.totalorder %s64, %s66
    %p70 = scmp.eq.s32.totalorder %s9, 0
    %p71 = por %p69, %p70
    %p72 = scmp.ne.s32.totalorder %s64, %s66
    %p73 = scmp.eq.s32.totalorder %s14, 1
    %p74 = por %p72, %p73
    %p75 = scmp.ne.s32.totalorder %s66, %s67
    %p76 = scmp.eq.s32.totalorder %s14, 0
    %p77 = por %p75, %p76
    %p78 = scmp.ne.s32.totalorder %s66, %s67
    %p79 = scmp.eq.s32.totalorder %s15, 1
    %p80 = por %p78, %p79
    %p82 = scmp.ne.s32.totalorder %s67, %s81
    %p83 = scmp.eq.s32.totalorder %s15, 0
    %p84 = por %p82, %p83
    %s85 = ssub.s32 %s9, %s16
    %p86 = scmp.eq.s32.totalorder %s85, 0
    %s88 = sadd.s32 %s87, 1
    %s89 = scalar_select %p86, %s87, %s88
    %p92 = pneg %p86
    %p93 = scmp.eq.s32.totalorder %s9, 1
    %p94 = por %p92, %p93
    %p95 = scmp.ne.s32.totalorder %s87, %s90
    %p96 = scmp.eq.s32.totalorder %s9, 0
    %p97 = por %p95, %p96
    %p98 = scmp.ne.s32.totalorder %s87, %s90
    %p99 = scmp.eq.s32.totalorder %s14, 1
    %p100 = por %p98, %p99
    %p101 = scmp.ne.s32.totalorder %s90, %s91
    %p102 = scmp.eq.s32.totalorder %s14, 0
    %p103 = por %p101, %p102
    %p104 = scmp.ne.s32.totalorder %s90, %s91
    %p105 = scmp.eq.s32.totalorder %s15, 1
    %p106 = por %p104, %p105
    %p108 = scmp.ne.s32.totalorder %s91, %s107
    %p109 = scmp.eq.s32.totalorder %s15, 0
    %p110 = por %p108, %p109
    %p111 = scmp.le.s32.totalorder 1, %s9
    %p112 = scmp.lt.s32.totalorder %s9, 3
    %p113 = pnand %p111, %p112
    %p114 = pneg %p113
    // Predicated region
    $region9: #{d1_forward.5} parent=5 // pred_check
      _
    $region10: #{d1_forward.5} parent=5 // pred_check_branch
      %116 = sbr.rel (%p113) target = $region12
    $region11: #{d1_forward.5} parent=5 // pred_region
      %s117 = ssub.s32 %s9, 1
      // Predicated region
      $region13: #{d1_forward.5} parent=11 // pred_check
        %p118 = pneg %p56
      $region14: #{d1_forward.5} parent=11 // pred_check_branch
        %120 = sbr.rel (%p118) target = $region16
      $region15: #{d1_forward.5} parent=11 // pred_region
        _
      $region16: #{d1_forward.5} parent=11 // pred_fallthru
        _
      // Predicated region
      $region17: #{d1_forward.5} parent=11 // pred_check
        %p121 = pneg %p77
      $region18: #{d1_forward.5} parent=11 // pred_check_branch
        %123 = sbr.rel (%p121) target = $region20
      $region19: #{d1_forward.5} parent=11 // pred_region
        _
      $region20: #{d1_forward.5} parent=11 // pred_fallthru
        _
    $region12: #{d1_forward.5} parent=5 // pred_fallthru
      _
    %p124 = scmp.lt.s32.totalorder %s9, 2
    // Predicated region
    $region21: #{d1_forward.5} parent=5 // pred_check
      %p125 = pneg %p124
    $region22: #{d1_forward.5} parent=5 // pred_check_branch
      %127 = sbr.rel (%p125) target = $region24
    $region23: #{d1_forward.5} parent=5 // pred_region
      // Predicated region
      $region25: #{d1_forward.5} parent=23 // pred_check
        %p128 = pneg %p29
      $region26: #{d1_forward.5} parent=23 // pred_check_branch
        %130 = sbr.rel (%p128) target = $region28
      $region27: #{d1_forward.5} parent=23 // pred_region
        %s131 = smul.u32 32, %s9
        %p132 = scmp.lt.s32.totalorder %s131, 63
        %s133 = scalar_select %p132, %s131, 63
        %s134 = smul.addr %s133, 8
        %s135 = scalar_lea.vmem %s0, %s134
        %s136 = smul.u32 32, %s9
      $region28: #{d1_forward.5} parent=23 // pred_fallthru
        _
    $region24: #{d1_forward.5} parent=5 // pred_fallthru
      _
    %p137 = scmp.le.s32.totalorder 1, %s9
    %p138 = scmp.lt.s32.totalorder %s9, 3
    %p139 = pnand %p137, %p138
    %p140 = pneg %p139
    // Predicated region
    $region29: #{d1_forward.5} parent=5 // pred_check
      _
    $region30: #{d1_forward.5} parent=5 // pred_check_branch
      %142 = sbr.rel (%p139) target = $region32
    $region31: #{d1_forward.5} parent=5 // pred_region
      %s143 = ssub.s32 %s9, 1
      %s144 = smul.u32 32, %s14
      %p145 = scmp.lt.s32.totalorder %s144, 63
      %s146 = scalar_select %p145, %s144, 63
      %s147 = smul.addr %s146, 8
      %s148 = scalar_lea.vmem %s0, %s147
      %p149 = pneg %p35
      %p150 = pneg %p32
      %p151 = pneg %p56
      %p152 = pneg %p53
      %p153 = pneg %p77
      %p154 = pneg %p74
      %p155 = pneg %p103
      %p156 = pneg %p100
      %s157 = smul.u32 32, %s14
      %p158 = scmp.lt.s32.totalorder %s157, 63
      %s159 = scalar_select %p158, %s157, 63
      %s160 = smul.addr %s159, 8
      %s161 = scalar_lea.vmem %s3, %s160
      %s162 = smul.u32 32, %s14
      %p163 = scmp.lt.s32.totalorder %s162, 63
      %s164 = scalar_select %p163, %s162, 63
      %s165 = smul.addr %s164, 8
      %s166 = scalar_lea.vmem %s0, %s165
      %s167 = smul.u32 32, %s14
      %s168 = smul.u32 32, %s14
      %p169 = scmp.lt.s32.totalorder %s168, 63
      %s170 = scalar_select %p169, %s168, 63
      %s171 = smul.addr %s170, 8
      %s172 = scalar_lea.vmem %s3, %s171
      %s173 = smul.u32 32, %s14
      %v174 = vld [vmem:[%s166] sm:$0xff]
      %v175 = vld [vmem:[%s166 + $0x8] sm:$0xff]
      %v176 = vld [vmem:[%s166 + $0x10] sm:$0xff]
      %v177 = vld [vmem:[%s166 + $0x18] sm:$0xff]
      %v178 = vld [vmem:[%s166 + $0x20] sm:$0xff]
      %v179 = vld [vmem:[%s166 + $0x28] sm:$0xff]
      %v180 = vld [vmem:[%s166 + $0x30] sm:$0xff]
      %v181 = vld [vmem:[%s166 + $0x38] sm:$0xff]
      %v182 = vld [vmem:[%s166 + $0x40] sm:$0xff]
      %v183 = vld [vmem:[%s166 + $0x48] sm:$0xff]
      %v184 = vld [vmem:[%s166 + $0x50] sm:$0xff]
      %v185 = vld [vmem:[%s166 + $0x58] sm:$0xff]
      %v186 = vld [vmem:[%s166 + $0x60] sm:$0xff]
      %v187 = vld [vmem:[%s166 + $0x68] sm:$0xff]
      %v188 = vld [vmem:[%s166 + $0x70] sm:$0xff]
      %v189 = vld [vmem:[%s166 + $0x78] sm:$0xff]
      %v190 = vld [vmem:[%s166 + $0x80] sm:$0xff]
      %v191 = vld [vmem:[%s166 + $0x88] sm:$0xff]
      %v192 = vld [vmem:[%s166 + $0x90] sm:$0xff]
      %v193 = vld [vmem:[%s166 + $0x98] sm:$0xff]
      %v194 = vld [vmem:[%s166 + $0xa0] sm:$0xff]
      %v195 = vld [vmem:[%s166 + $0xa8] sm:$0xff]
      %v196 = vld [vmem:[%s166 + $0xb0] sm:$0xff]
      %v197 = vld [vmem:[%s166 + $0xb8] sm:$0xff]
      %v198 = vld [vmem:[%s166 + $0xc0] sm:$0xff]
      %v199 = vld [vmem:[%s166 + $0xc8] sm:$0xff]
      %v200 = vld [vmem:[%s166 + $0xd0] sm:$0xff]
      %v201 = vld [vmem:[%s166 + $0xd8] sm:$0xff]
      %v202 = vld [vmem:[%s166 + $0xe0] sm:$0xff]
      %v203 = vld [vmem:[%s166 + $0xe8] sm:$0xff]
      %v204 = vld [vmem:[%s166 + $0xf0] sm:$0xff]
      %v205 = vld [vmem:[%s166 + $0xf8] sm:$0xff]
      %v206 = vld [vmem:[%s1] sm:$0xff]
      %v207 = vld [vmem:[%s1 + $0x8] sm:$0xff]
      %v208 = vld [vmem:[%s2] sm:$0x1]
      %v210 = vlaneseq
      %v211 = vshrl.u32 %v210, 7
      %v212 = vsub.s32 0, %v211
      %v213 = vrot.slane %v208, %v212
      %vm215 = vcmask 130048
      %v217 = vsel %vm215, %v174, 0
      %v220 = vsel %vm215, %v175, 0
      %v223 = vsel %vm215, %v176, 0
      %v226 = vsel %vm215, %v177, 0
      %v229 = vsel %vm215, %v178, 0
      %v232 = vsel %vm215, %v179, 0
      %v235 = vsel %vm215, %v180, 0
      %v238 = vsel %vm215, %v181, 0
      %v241 = vsel %vm215, %v182, 0
      %v244 = vsel %vm215, %v183, 0
      %v247 = vsel %vm215, %v184, 0
      %v250 = vsel %vm215, %v185, 0
      %v253 = vsel %vm215, %v186, 0
      %v256 = vsel %vm215, %v187, 0
      %v259 = vsel %vm215, %v188, 0
      %v262 = vsel %vm215, %v189, 0
      %v265 = vsel %vm215, %v190, 0
      %v268 = vsel %vm215, %v191, 0
      %v271 = vsel %vm215, %v192, 0
      %v274 = vsel %vm215, %v193, 0
      %v277 = vsel %vm215, %v194, 0
      %v280 = vsel %vm215, %v195, 0
      %v283 = vsel %vm215, %v196, 0
      %v286 = vsel %vm215, %v197, 0
      %v289 = vsel %vm215, %v198, 0
      %v292 = vsel %vm215, %v199, 0
      %v295 = vsel %vm215, %v200, 0
      %v298 = vsel %vm215, %v201, 0
      %v301 = vsel %vm215, %v202, 0
      %v304 = vsel %vm215, %v203, 0
      %v307 = vsel %vm215, %v204, 0
      %v310 = vsel %vm215, %v205, 0
      %312 = vmatprep.subr.mxu0 0.0
      %313 = vmatpush1.msra.mxu0 %v206
      %314 = vmatprep.subr.mxu0 0.0
      %315 = vmatpush1.msra.mxu0 %v207
      %316 = vmatprep.subr.mxu0 0.0
      %317 = vmatpush1.msra.mxu0 0.0
      %318 = vmatprep.subr.mxu0 0.0
      %319 = vmatpush1.msra.mxu0 0.0
      %320 = vmatprep.subr.mxu0 0.0
      %321 = vmatpush1.msra.mxu0 0.0
      %322 = vmatprep.subr.mxu0 0.0
      %323 = vmatpush1.msra.mxu0 0.0
      %324 = vmatprep.subr.mxu0 0.0
      %325 = vmatpush1.msra.mxu0 0.0
      %326 = vmatprep.subr.mxu0 0.0
      %327 = vmatpush1.msra.mxu0 0.0
      %328 = vmatprep.subr.mxu0 0.0
      %329 = vmatpush1.msra.mxu0 0.0
      %330 = vmatprep.subr.mxu0 0.0
      %331 = vmatpush1.msra.mxu0 0.0
      %332 = vmatprep.subr.mxu0 0.0
      %333 = vmatpush1.msra.mxu0 0.0
      %334 = vmatprep.subr.mxu0 0.0
      %335 = vmatpush1.msra.mxu0 0.0
      %336 = vmatprep.subr.mxu0 0.0
      %337 = vmatpush1.msra.mxu0 0.0
      %338 = vmatprep.subr.mxu0 0.0
      %339 = vmatpush1.msra.mxu0 0.0
      %340 = vmatprep.subr.mxu0 0.0
      %341 = vmatpush1.msra.mxu0 0.0
      %342 = vmatprep.subr.mxu0 0.0
      %343 = vmatpush1.msra.mxu0 0.0
      %344 = vmatprep.subr.mxu0 0.0
      %345 = vmatpush1.msra.mxu0 0.0
      %346 = vmatprep.subr.mxu0 0.0
      %347 = vmatpush1.msra.mxu0 0.0
      %348 = vmatprep.subr.mxu0 0.0
      %349 = vmatpush1.msra.mxu0 0.0
      %350 = vmatprep.subr.mxu0 0.0
      %351 = vmatpush1.msra.mxu0 0.0
      %352 = vmatprep.subr.mxu0 0.0
      %353 = vmatpush1.msra.mxu0 0.0
      %354 = vmatprep.subr.mxu0 0.0
      %355 = vmatpush1.msra.mxu0 0.0
      %356 = vmatprep.subr.mxu0 0.0
      %357 = vmatpush1.msra.mxu0 0.0
      %358 = vmatprep.subr.mxu0 0.0
      %359 = vmatpush1.msra.mxu0 0.0
      %360 = vmatprep.subr.mxu0 0.0
      %361 = vmatpush1.msra.mxu0 0.0
      %362 = vmatprep.subr.mxu0 0.0
      %363 = vmatpush1.msra.mxu0 0.0
      %364 = vmatprep.subr.mxu0 0.0
      %365 = vmatpush1.msra.mxu0 0.0
      %366 = vmatprep.subr.mxu0 0.0
      %367 = vmatpush1.msra.mxu0 0.0
      %368 = vmatprep.subr.mxu0 0.0
      %369 = vmatpush1.msra.mxu0 0.0
      %370 = vmatprep.subr.mxu0 0.0
      %371 = vmatpush1.msra.mxu0 0.0
      %372 = vmatprep.subr.mxu0 0.0
      %373 = vmatpush1.msra.mxu0 0.0
      %374 = vmatprep.subr.mxu0 0.0
      %375 = vmatpush1.msra.mxu0 0.0
      %376 = vmatprep.mubr.f32.mxu0 0.0
      %377 = vmatmul.mubr.f32.gmra.mrb[0].mxu0 %v217
      %v378 = vpop.f32.mrb[0].mxu0
      %v379 = vadd.f32 %v213, %v378
      %v380 = vpop.f32.mrb[0].mxu0
      %381 = vmatprep.mubr.f32.mxu0 0.0
      %382 = vmatmul.mubr.f32.gmra.mrb[0].mxu0 %v220
      %v383 = vpop.f32.mrb[0].mxu0
      %v384 = vadd.f32 %v213, %v383
      %v385 = vpop.f32.mrb[0].mxu0
      %386 = vmatprep.mubr.f32.mxu0 0.0
      %387 = vmatmul.mubr.f32.gmra.mrb[0].mxu0 %v223
      %v388 = vpop.f32.mrb[0].mxu0
      %v389 = vadd.f32 %v213, %v388
      %v390 = vpop.f32.mrb[0].mxu0
      %391 = vmatprep.mubr.f32.mxu0 0.0
      %392 = vmatmul.mubr.f32.gmra.mrb[0].mxu0 %v226
      %v393 = vpop.f32.mrb[0].mxu0
      %v394 = vadd.f32 %v213, %v393
      %v395 = vpop.f32.mrb[0].mxu0
      %396 = vmatprep.mubr.f32.mxu0 0.0
      %397 = vmatmul.mubr.f32.gmra.mrb[0].mxu0 %v229
      %v398 = vpop.f32.mrb[0].mxu0
      %v399 = vadd.f32 %v213, %v398
      %v400 = vpop.f32.mrb[0].mxu0
      %401 = vmatprep.mubr.f32.mxu0 0.0
      %402 = vmatmul.mubr.f32.gmra.mrb[0].mxu0 %v232
      %v403 = vpop.f32.mrb[0].mxu0
      %v404 = vadd.f32 %v213, %v403
      %v405 = vpop.f32.mrb[0].mxu0
      %406 = vmatprep.mubr.f32.mxu0 0.0
      %407 = vmatmul.mubr.f32.gmra.mrb[0].mxu0 %v235
      %v408 = vpop.f32.mrb[0].mxu0
      %v409 = vadd.f32 %v213, %v408
      %v410 = vpop.f32.mrb[0].mxu0
      %411 = vmatprep.mubr.f32.mxu0 0.0
      %412 = vmatmul.mubr.f32.gmra.mrb[0].mxu0 %v238
      %v413 = vpop.f32.mrb[0].mxu0
      %v414 = vadd.f32 %v213, %v413
      %v415 = vpop.f32.mrb[0].mxu0
      %416 = vmatprep.mubr.f32.mxu0 0.0
      %417 = vmatmul.mubr.f32.gmra.mrb[0].mxu0 %v241
      %v418 = vpop.f32.mrb[0].mxu0
      %v419 = vadd.f32 %v213, %v418
      %v420 = vpop.f32.mrb[0].mxu0
      %421 = vmatprep.mubr.f32.mxu0 0.0
      %422 = vmatmul.mubr.f32.gmra.mrb[0].mxu0 %v244
      %v423 = vpop.f32.mrb[0].mxu0
      %v424 = vadd.f32 %v213, %v423
      %v425 = vpop.f32.mrb[0].mxu0
      %426 = vmatprep.mubr.f32.mxu0 0.0
      %427 = vmatmul.mubr.f32.gmra.mrb[0].mxu0 %v247
      %v428 = vpop.f32.mrb[0].mxu0
      %v429 = vadd.f32 %v213, %v428
      %v430 = vpop.f32.mrb[0].mxu0
      %431 = vmatprep.mubr.f32.mxu0 0.0
      %432 = vmatmul.mubr.f32.gmra.mrb[0].mxu0 %v250
      %v433 = vpop.f32.mrb[0].mxu0
      %v434 = vadd.f32 %v213, %v433
      %v435 = vpop.f32.mrb[0].mxu0
      %436 = vmatprep.mubr.f32.mxu0 0.0
      %437 = vmatmul.mubr.f32.gmra.mrb[0].mxu0 %v253
      %v438 = vpop.f32.mrb[0].mxu0
      %v439 = vadd.f32 %v213, %v438
      %v440 = vpop.f32.mrb[0].mxu0
      %441 = vmatprep.mubr.f32.mxu0 0.0
      %442 = vmatmul.mubr.f32.gmra.mrb[0].mxu0 %v256
      %v443 = vpop.f32.mrb[0].mxu0
      %v444 = vadd.f32 %v213, %v443
      %v445 = vpop.f32.mrb[0].mxu0
      %446 = vmatprep.mubr.f32.mxu0 0.0
      %447 = vmatmul.mubr.f32.gmra.mrb[0].mxu0 %v259
      %v448 = vpop.f32.mrb[0].mxu0
      %v449 = vadd.f32 %v213, %v448
      %v450 = vpop.f32.mrb[0].mxu0
      %451 = vmatprep.mubr.f32.mxu0 0.0
      %452 = vmatmul.mubr.f32.gmra.mrb[0].mxu0 %v262
      %v453 = vpop.f32.mrb[0].mxu0
      %v454 = vadd.f32 %v213, %v453
      %v455 = vpop.f32.mrb[0].mxu0
      %456 = vmatprep.mubr.f32.mxu0 0.0
      %457 = vmatmul.mubr.f32.gmra.mrb[0].mxu0 %v265
      %v458 = vpop.f32.mrb[0].mxu0
      %v459 = vadd.f32 %v213, %v458
      %v460 = vpop.f32.mrb[0].mxu0
      %461 = vmatprep.mubr.f32.mxu0 0.0
      %462 = vmatmul.mubr.f32.gmra.mrb[0].mxu0 %v268
      %v463 = vpop.f32.mrb[0].mxu0
      %v464 = vadd.f32 %v213, %v463
      %v465 = vpop.f32.mrb[0].mxu0
      %466 = vmatprep.mubr.f32.mxu0 0.0
      %467 = vmatmul.mubr.f32.gmra.mrb[0].mxu0 %v271
      %v468 = vpop.f32.mrb[0].mxu0
      %v469 = vadd.f32 %v213, %v468
      %v470 = vpop.f32.mrb[0].mxu0
      %471 = vmatprep.mubr.f32.mxu0 0.0
      %472 = vmatmul.mubr.f32.gmra.mrb[0].mxu0 %v274
      %v473 = vpop.f32.mrb[0].mxu0
      %v474 = vadd.f32 %v213, %v473
      %v475 = vpop.f32.mrb[0].mxu0
      %476 = vmatprep.mubr.f32.mxu0 0.0
      %477 = vmatmul.mubr.f32.gmra.mrb[0].mxu0 %v277
      %v478 = vpop.f32.mrb[0].mxu0
      %v479 = vadd.f32 %v213, %v478
      %v480 = vpop.f32.mrb[0].mxu0
      %481 = vmatprep.mubr.f32.mxu0 0.0
      %482 = vmatmul.mubr.f32.gmra.mrb[0].mxu0 %v280
      %v483 = vpop.f32.mrb[0].mxu0
      %v484 = vadd.f32 %v213, %v483
      %v485 = vpop.f32.mrb[0].mxu0
      %486 = vmatprep.mubr.f32.mxu0 0.0
      %487 = vmatmul.mubr.f32.gmra.mrb[0].mxu0 %v283
      %v488 = vpop.f32.mrb[0].mxu0
      %v489 = vadd.f32 %v213, %v488
      %v490 = vpop.f32.mrb[0].mxu0
      %491 = vmatprep.mubr.f32.mxu0 0.0
      %492 = vmatmul.mubr.f32.gmra.mrb[0].mxu0 %v286
      %v493 = vpop.f32.mrb[0].mxu0
      %v494 = vadd.f32 %v213, %v493
      %v495 = vpop.f32.mrb[0].mxu0
      %496 = vmatprep.mubr.f32.mxu0 0.0
      %497 = vmatmul.mubr.f32.gmra.mrb[0].mxu0 %v289
      %v498 = vpop.f32.mrb[0].mxu0
      %v499 = vadd.f32 %v213, %v498
      %v500 = vpop.f32.mrb[0].mxu0
      %501 = vmatprep.mubr.f32.mxu0 0.0
      %502 = vmatmul.mubr.f32.gmra.mrb[0].mxu0 %v292
      %v503 = vpop.f32.mrb[0].mxu0
      %v504 = vadd.f32 %v213, %v503
      %v505 = vpop.f32.mrb[0].mxu0
      %506 = vmatprep.mubr.f32.mxu0 0.0
      %507 = vmatmul.mubr.f32.gmra.mrb[0].mxu0 %v295
      %v508 = vpop.f32.mrb[0].mxu0
      %v509 = vadd.f32 %v213, %v508
      %v510 = vpop.f32.mrb[0].mxu0
      %511 = vmatprep.mubr.f32.mxu0 0.0
      %512 = vmatmul.mubr.f32.gmra.mrb[0].mxu0 %v298
      %v513 = vpop.f32.mrb[0].mxu0
      %v514 = vadd.f32 %v213, %v513
      %v515 = vpop.f32.mrb[0].mxu0
      %516 = vmatprep.mubr.f32.mxu0 0.0
      %517 = vmatmul.mubr.f32.gmra.mrb[0].mxu0 %v301
      %v518 = vpop.f32.mrb[0].mxu0
      %v519 = vadd.f32 %v213, %v518
      %v520 = vpop.f32.mrb[0].mxu0
      %521 = vmatprep.mubr.f32.mxu0 0.0
      %522 = vmatmul.mubr.f32.gmra.mrb[0].mxu0 %v304
      %v523 = vpop.f32.mrb[0].mxu0
      %v524 = vadd.f32 %v213, %v523
      %v525 = vpop.f32.mrb[0].mxu0
      %526 = vmatprep.mubr.f32.mxu0 0.0
      %527 = vmatmul.mubr.f32.gmra.mrb[0].mxu0 %v307
      %v528 = vpop.f32.mrb[0].mxu0
      %v529 = vadd.f32 %v213, %v528
      %v530 = vpop.f32.mrb[0].mxu0
      %531 = vmatprep.mubr.f32.mxu0 0.0
      %532 = vmatmul.mubr.f32.gmra.mrb[0].mxu0 %v310
      %v533 = vpop.f32.mrb[0].mxu0
      %v534 = vadd.f32 %v213, %v533
      %v535 = vpop.f32.mrb[0].mxu0
      %536 = vdwg.mxu0
      %vm537 = vcmp.ge.f32.partialorder %v379, 0.0
      %vm538 = vcmp.ge.f32.partialorder %v384, 0.0
      %vm539 = vcmp.ge.f32.partialorder %v389, 0.0
      %vm540 = vcmp.ge.f32.partialorder %v394, 0.0
      %vm541 = vcmp.ge.f32.partialorder %v399, 0.0
      %vm542 = vcmp.ge.f32.partialorder %v404, 0.0
      %vm543 = vcmp.ge.f32.partialorder %v409, 0.0
      %vm544 = vcmp.ge.f32.partialorder %v414, 0.0
      %vm545 = vcmp.ge.f32.partialorder %v419, 0.0
      %vm546 = vcmp.ge.f32.partialorder %v424, 0.0
      %vm547 = vcmp.ge.f32.partialorder %v429, 0.0
      %vm548 = vcmp.ge.f32.partialorder %v434, 0.0
      %vm549 = vcmp.ge.f32.partialorder %v439, 0.0
      %vm550 = vcmp.ge.f32.partialorder %v444, 0.0
      %vm551 = vcmp.ge.f32.partialorder %v449, 0.0
      %vm552 = vcmp.ge.f32.partialorder %v454, 0.0
      %vm553 = vcmp.ge.f32.partialorder %v459, 0.0
      %vm554 = vcmp.ge.f32.partialorder %v464, 0.0
      %vm555 = vcmp.ge.f32.partialorder %v469, 0.0
      %vm556 = vcmp.ge.f32.partialorder %v474, 0.0
      %vm557 = vcmp.ge.f32.partialorder %v479, 0.0
      %vm558 = vcmp.ge.f32.partialorder %v484, 0.0
      %vm559 = vcmp.ge.f32.partialorder %v489, 0.0
      %vm560 = vcmp.ge.f32.partialorder %v494, 0.0
      %vm561 = vcmp.ge.f32.partialorder %v499, 0.0
      %vm562 = vcmp.ge.f32.partialorder %v504, 0.0
      %vm563 = vcmp.ge.f32.partialorder %v509, 0.0
      %vm564 = vcmp.ge.f32.partialorder %v514, 0.0
      %vm565 = vcmp.ge.f32.partialorder %v519, 0.0
      %vm566 = vcmp.ge.f32.partialorder %v524, 0.0
      %vm567 = vcmp.ge.f32.partialorder %v529, 0.0
      %vm568 = vcmp.ge.f32.partialorder %v534, 0.0
      %v569 = vmul.f32 %v379, 0.05
      %v570 = vmul.f32 %v384, 0.05
      %v571 = vmul.f32 %v389, 0.05
      %v572 = vmul.f32 %v394, 0.05
      %v573 = vmul.f32 %v399, 0.05
      %v574 = vmul.f32 %v404, 0.05
      %v575 = vmul.f32 %v409, 0.05
      %v576 = vmul.f32 %v414, 0.05
      %v577 = vmul.f32 %v419, 0.05
      %v578 = vmul.f32 %v424, 0.05
      %v579 = vmul.f32 %v429, 0.05
      %v580 = vmul.f32 %v434, 0.05
      %v581 = vmul.f32 %v439, 0.05
      %v582 = vmul.f32 %v444, 0.05
      %v583 = vmul.f32 %v449, 0.05
      %v584 = vmul.f32 %v454, 0.05
      %v585 = vmul.f32 %v459, 0.05
      %v586 = vmul.f32 %v464, 0.05
      %v587 = vmul.f32 %v469, 0.05
      %v588 = vmul.f32 %v474, 0.05
      %v589 = vmul.f32 %v479, 0.05
      %v590 = vmul.f32 %v484, 0.05
      %v591 = vmul.f32 %v489, 0.05
      %v592 = vmul.f32 %v494, 0.05
      %v593 = vmul.f32 %v499, 0.05
      %v594 = vmul.f32 %v504, 0.05
      %v595 = vmul.f32 %v509, 0.05
      %v596 = vmul.f32 %v514, 0.05
      %v597 = vmul.f32 %v519, 0.05
      %v598 = vmul.f32 %v524, 0.05
      %v599 = vmul.f32 %v529, 0.05
      %v600 = vmul.f32 %v534, 0.05
      %v601 = vsel %vm537, %v379, %v569
      %v602 = vsel %vm538, %v384, %v570
      %v603 = vsel %vm539, %v389, %v571
      %v604 = vsel %vm540, %v394, %v572
      %v605 = vsel %vm541, %v399, %v573
      %v606 = vsel %vm542, %v404, %v574
      %v607 = vsel %vm543, %v409, %v575
      %v608 = vsel %vm544, %v414, %v576
      %v609 = vsel %vm545, %v419, %v577
      %v610 = vsel %vm546, %v424, %v578
      %v611 = vsel %vm547, %v429, %v579
      %v612 = vsel %vm548, %v434, %v580
      %v613 = vsel %vm549, %v439, %v581
      %v614 = vsel %vm550, %v444, %v582
      %v615 = vsel %vm551, %v449, %v583
      %v616 = vsel %vm552, %v454, %v584
      %v617 = vsel %vm553, %v459, %v585
      %v618 = vsel %vm554, %v464, %v586
      %v619 = vsel %vm555, %v469, %v587
      %v620 = vsel %vm556, %v474, %v588
      %v621 = vsel %vm557, %v479, %v589
      %v622 = vsel %vm558, %v484, %v590
      %v623 = vsel %vm559, %v489, %v591
      %v624 = vsel %vm560, %v494, %v592
      %v625 = vsel %vm561, %v499, %v593
      %v626 = vsel %vm562, %v504, %v594
      %v627 = vsel %vm563, %v509, %v595
      %v628 = vsel %vm564, %v514, %v596
      %v629 = vsel %vm565, %v519, %v597
      %v630 = vsel %vm566, %v524, %v598
      %v631 = vsel %vm567, %v529, %v599
      %v632 = vsel %vm568, %v534, %v600
      %633 = vst [vmem:[%s172] sm:$0xff] %v601
      %634 = vst [vmem:[%s172 + $0x8] sm:$0xff] %v602
      %635 = vst [vmem:[%s172 + $0x10] sm:$0xff] %v603
      %636 = vst [vmem:[%s172 + $0x18] sm:$0xff] %v604
      %637 = vst [vmem:[%s172 + $0x20] sm:$0xff] %v605
      %638 = vst [vmem:[%s172 + $0x28] sm:$0xff] %v606
      %639 = vst [vmem:[%s172 + $0x30] sm:$0xff] %v607
      %640 = vst [vmem:[%s172 + $0x38] sm:$0xff] %v608
      %641 = vst [vmem:[%s172 + $0x40] sm:$0xff] %v609
      %642 = vst [vmem:[%s172 + $0x48] sm:$0xff] %v610
      %643 = vst [vmem:[%s172 + $0x50] sm:$0xff] %v611
      %644 = vst [vmem:[%s172 + $0x58] sm:$0xff] %v612
      %645 = vst [vmem:[%s172 + $0x60] sm:$0xff] %v613
      %646 = vst [vmem:[%s172 + $0x68] sm:$0xff] %v614
      %647 = vst [vmem:[%s172 + $0x70] sm:$0xff] %v615
      %648 = vst [vmem:[%s172 + $0x78] sm:$0xff] %v616
      %649 = vst [vmem:[%s172 + $0x80] sm:$0xff] %v617
      %650 = vst [vmem:[%s172 + $0x88] sm:$0xff] %v618
      %651 = vst [vmem:[%s172 + $0x90] sm:$0xff] %v619
      %652 = vst [vmem:[%s172 + $0x98] sm:$0xff] %v620
      %653 = vst [vmem:[%s172 + $0xa0] sm:$0xff] %v621
      %654 = vst [vmem:[%s172 + $0xa8] sm:$0xff] %v622
      %655 = vst [vmem:[%s172 + $0xb0] sm:$0xff] %v623
      %656 = vst [vmem:[%s172 + $0xb8] sm:$0xff] %v624
      %657 = vst [vmem:[%s172 + $0xc0] sm:$0xff] %v625
      %658 = vst [vmem:[%s172 + $0xc8] sm:$0xff] %v626
      %659 = vst [vmem:[%s172 + $0xd0] sm:$0xff] %v627
      %660 = vst [vmem:[%s172 + $0xd8] sm:$0xff] %v628
      %661 = vst [vmem:[%s172 + $0xe0] sm:$0xff] %v629
      %662 = vst [vmem:[%s172 + $0xe8] sm:$0xff] %v630
      %663 = vst [vmem:[%s172 + $0xf0] sm:$0xff] %v631
      %664 = vst [vmem:[%s172 + $0xf8] sm:$0xff] %v632
      %s665 = smul.u32 32, %s14
      %p666 = scmp.lt.s32.totalorder %s665, 63
      %s667 = scalar_select %p666, %s665, 63
      %s668 = smul.addr %s667, 8
      %s669 = scalar_lea.vmem %s3, %s668
      // Predicated region
      $region33: #{d1_forward.5} parent=31 // pred_check
        %p670 = pneg %p100
      $region34: #{d1_forward.5} parent=31 // pred_check_branch
        %672 = sbr.rel (%p670) target = $region36
      $region35: #{d1_forward.5} parent=31 // pred_region
        %s673 = smul.u32 32, %s14
      $region36: #{d1_forward.5} parent=31 // pred_fallthru
        _
    $region32: #{d1_forward.5} parent=5 // pred_fallthru
      _
    %p674 = scmp.le.s32.totalorder 2, %s9
    // Predicated region
    $region37: #{d1_forward.5} parent=5 // pred_check
      %p675 = pneg %p674
    $region38: #{d1_forward.5} parent=5 // pred_check_branch
      %677 = sbr.rel (%p675) target = $region40
    $region39: #{d1_forward.5} parent=5 // pred_region
      %s678 = ssub.s32 %s9, 2
      // Predicated region
      $region41: #{d1_forward.5} parent=39 // pred_check
        %p679 = pneg %p106
      $region42: #{d1_forward.5} parent=39 // pred_check_branch
        %681 = sbr.rel (%p679) target = $region44
      $region43: #{d1_forward.5} parent=39 // pred_region
        %s682 = smul.u32 32, %s15
        %p683 = scmp.lt.s32.totalorder %s682, 63
        %s684 = scalar_select %p683, %s682, 63
        %s685 = smul.addr %s684, 8
        %s686 = scalar_lea.vmem %s3, %s685
      $region44: #{d1_forward.5} parent=39 // pred_fallthru
        _
    $region40: #{d1_forward.5} parent=5 // pred_fallthru
      _
  $region6: #{d1_forward.5} parent=0 // loop_footer
    %s13 = sadd.s32 1, %s9
  $region7: #{d1_forward.5} parent=0 // loop_footer_branch
    %8 = sbr.rel target = $region3
  $region8: #{d1_forward.5} parent=0 // loop_exit
    _

// kernel: d1_forward.6
$region0: #{d1_forward.6}
  #allocation0 [shape = 'u32[]', space=smem, size = 0x4, offset = 0x4, fixed_abs, tag = 'smem constant byte address 0x4 - core index']
  #allocation1 [shape = 'u32[144,128]{1,0:T(1,128)}', space=vmem, size = 0x12000, scoped, tag = 'internal scratch']
  %s0 = inlined_call_operand.vmem [shape: f32[128,128], index: 0, kind: input, shape index: {}]
  %s1 = inlined_call_operand.vmem [shape: f32[128,128], index: 1, kind: input, shape index: {}]
  %s2 = inlined_call_operand.vmem [shape: f32[128,128], index: 2, kind: output, shape index: {0}]
  %s3 = inlined_call_operand.vmem [shape: f32[2,1,128], index: 3, kind: output, shape index: {1}]
  %s4 = inlined_call_operand.vmem [shape: f32[2,1,128], index: 4, kind: output, shape index: {2}]
  %5 = xla_tuple %s2, %s3, %s4
  %s6 = sld [smem:[#allocation0]]
  $region57: #{d1_forward.6} parent=0
    _
  %s8 = ssub.s32 1, %s6
  %s9 = scalar_select 0, %s8, %s6
  loop: start=0, step=1, limit=4
  $region2: #{d1_forward.6} parent=0 // loop_pre_header
    _
  $region3: #{d1_forward.6} parent=0 // loop_header
    %s11 = sphi 0, %s15
    %p12 = scmp.ge.s32.totalorder %s11, 4
    %s21 = sphi 0, %s23
    %s24 = sphi 0, %s21
    %s25 = sphi 0, %s24
    %s41 = sphi 0, %s25
    %s45 = sphi 0, %s45
    %s47 = sphi 0, %s45
    %s48 = sphi 0, %s47
    %s62 = sphi 0, %s48
    %s68 = sphi 0, %s70
    %s71 = sphi 0, %s68
    %s72 = sphi 0, %s71
    %s88 = sphi 0, %s72
    %s94 = sphi 0, %s96
    %s97 = sphi 0, %s94
    %s98 = sphi 0, %s97
    %s114 = sphi 0, %s98
    %s120 = sphi 0, %s122
    %s123 = sphi 0, %s120
    %s124 = sphi 0, %s123
    %s140 = sphi 0, %s124
  $region4: #{d1_forward.6} parent=0 // loop_header_branch
    %14 = sbr.rel (%p12) target = $region8
  $region5: #{d1_forward.6} parent=0 // loop_body
    %s16 = ssub.s32 %s11, 1
    %s17 = ssub.s32 %s11, 2
    %s18 = sadd.s32 %s11, 1
    %s19 = ssub.s32 %s11, %s18
    %p20 = scmp.eq.s32.totalorder %s19, 0
    %s22 = sadd.s32 %s21, 1
    %s23 = scalar_select %p20, %s21, %s22
    %p26 = pneg %p20
    %p27 = scmp.eq.s32.totalorder %s11, 1
    %p28 = por %p26, %p27
    %p29 = scmp.ne.s32.totalorder %s21, %s24
    %p30 = scmp.eq.s32.totalorder %s11, 0
    %p31 = por %p29, %p30
    %p32 = scmp.ne.s32.totalorder %s21, %s24
    %p33 = scmp.eq.s32.totalorder %s16, 1
    %p34 = por %p32, %p33
    %p35 = scmp.ne.s32.totalorder %s24, %s25
    %p36 = scmp.eq.s32.totalorder %s16, 0
    %p37 = por %p35, %p36
    %p38 = scmp.ne.s32.totalorder %s24, %s25
    %p39 = scmp.eq.s32.totalorder %s17, 1
    %p40 = por %p38, %p39
    %p42 = scmp.ne.s32.totalorder %s25, %s41
    %p43 = scmp.eq.s32.totalorder %s17, 0
    %p44 = por %p42, %p43
    %s46 = sadd.s32 %s45, 1
    %p49 = scmp.eq.s32.totalorder %s11, 1
    %p50 = scmp.ne.s32.totalorder %s45, %s47
    %p51 = scmp.eq.s32.totalorder %s11, 0
    %p52 = por %p50, %p51
    %p53 = scmp.ne.s32.totalorder %s45, %s47
    %p54 = scmp.eq.s32.totalorder %s16, 1
    %p55 = por %p53, %p54
    %p56 = scmp.ne.s32.totalorder %s47, %s48
    %p57 = scmp.eq.s32.totalorder %s16, 0
    %p58 = por %p56, %p57
    %p59 = scmp.ne.s32.totalorder %s47, %s48
    %p60 = scmp.eq.s32.totalorder %s17, 1
    %p61 = por %p59, %p60
    %p63 = scmp.ne.s32.totalorder %s48, %s62
    %p64 = scmp.eq.s32.totalorder %s17, 0
    %p65 = por %p63, %p64
    %s66 = ssub.s32 %s11, %s18
    %p67 = scmp.eq.s32.totalorder %s66, 0
    %s69 = sadd.s32 %s68, 1
    %s70 = scalar_select %p67, %s68, %s69
    %p73 = pneg %p67
    %p74 = scmp.eq.s32.totalorder %s11, 1
    %p75 = por %p73, %p74
    %p76 = scmp.ne.s32.totalorder %s68, %s71
    %p77 = scmp.eq.s32.totalorder %s11, 0
    %p78 = por %p76, %p77
    %p79 = scmp.ne.s32.totalorder %s68, %s71
    %p80 = scmp.eq.s32.totalorder %s16, 1
    %p81 = por %p79, %p80
    %p82 = scmp.ne.s32.totalorder %s71, %s72
    %p83 = scmp.eq.s32.totalorder %s16, 0
    %p84 = por %p82, %p83
    %p85 = scmp.ne.s32.totalorder %s71, %s72
    %p86 = scmp.eq.s32.totalorder %s17, 1
    %p87 = por %p85, %p86
    %p89 = scmp.ne.s32.totalorder %s72, %s88
    %p90 = scmp.eq.s32.totalorder %s17, 0
    %p91 = por %p89, %p90
    %s92 = ssub.s32 %s11, %s18
    %p93 = scmp.eq.s32.totalorder %s92, 0
    %s95 = sadd.s32 %s94, 1
    %s96 = scalar_select %p93, %s94, %s95
    %p99 = pneg %p93
    %p100 = scmp.eq.s32.totalorder %s11, 1
    %p101 = por %p99, %p100
    %p102 = scmp.ne.s32.totalorder %s94, %s97
    %p103 = scmp.eq.s32.totalorder %s11, 0
    %p104 = por %p102, %p103
    %p105 = scmp.ne.s32.totalorder %s94, %s97
    %p106 = scmp.eq.s32.totalorder %s16, 1
    %p107 = por %p105, %p106
    %p108 = scmp.ne.s32.totalorder %s97, %s98
    %p109 = scmp.eq.s32.totalorder %s16, 0
    %p110 = por %p108, %p109
    %p111 = scmp.ne.s32.totalorder %s97, %s98
    %p112 = scmp.eq.s32.totalorder %s17, 1
    %p113 = por %p111, %p112
    %p115 = scmp.ne.s32.totalorder %s98, %s114
    %p116 = scmp.eq.s32.totalorder %s17, 0
    %p117 = por %p115, %p116
    %s118 = ssub.s32 %s11, %s18
    %p119 = scmp.eq.s32.totalorder %s118, 0
    %s121 = sadd.s32 %s120, 1
    %s122 = scalar_select %p119, %s120, %s121
    %p125 = pneg %p119
    %p126 = scmp.eq.s32.totalorder %s11, 1
    %p127 = por %p125, %p126
    %p128 = scmp.ne.s32.totalorder %s120, %s123
    %p129 = scmp.eq.s32.totalorder %s11, 0
    %p130 = por %p128, %p129
    %p131 = scmp.ne.s32.totalorder %s120, %s123
    %p132 = scmp.eq.s32.totalorder %s16, 1
    %p133 = por %p131, %p132
    %p134 = scmp.ne.s32.totalorder %s123, %s124
    %p135 = scmp.eq.s32.totalorder %s16, 0
    %p136 = por %p134, %p135
    %p137 = scmp.ne.s32.totalorder %s123, %s124
    %p138 = scmp.eq.s32.totalorder %s17, 1
    %p139 = por %p137, %p138
    %p141 = scmp.ne.s32.totalorder %s124, %s140
    %p142 = scmp.eq.s32.totalorder %s17, 0
    %p143 = por %p141, %p142
    %p144 = scmp.le.s32.totalorder 1, %s11
    %p145 = scmp.lt.s32.totalorder %s11, 3
    %p146 = pnand %p144, %p145
    %p147 = pneg %p146
    // Predicated region
    $region9: #{d1_forward.6} parent=5 // pred_check
      _
    $region10: #{d1_forward.6} parent=5 // pred_check_branch
      %149 = sbr.rel (%p146) target = $region12
    $region11: #{d1_forward.6} parent=5 // pred_region
      %s150 = ssub.s32 %s11, 1
      // Predicated region
      $region13: #{d1_forward.6} parent=11 // pred_check
        %p151 = pneg %p58
      $region14: #{d1_forward.6} parent=11 // pred_check_branch
        %153 = sbr.rel (%p151) target = $region16
      $region15: #{d1_forward.6} parent=11 // pred_region
        _
      $region16: #{d1_forward.6} parent=11 // pred_fallthru
        _
    $region12: #{d1_forward.6} parent=5 // pred_fallthru
      _
    %p154 = scmp.lt.s32.totalorder %s11, 2
    // Predicated region
    $region17: #{d1_forward.6} parent=5 // pred_check
      %p155 = pneg %p154
    $region18: #{d1_forward.6} parent=5 // pred_check_branch
      %157 = sbr.rel (%p155) target = $region20
    $region19: #{d1_forward.6} parent=5 // pred_region
      // Predicated region
      $region21: #{d1_forward.6} parent=19 // pred_check
        %p158 = pneg %p31
      $region22: #{d1_forward.6} parent=19 // pred_check_branch
        %160 = sbr.rel (%p158) target = $region24
      $region23: #{d1_forward.6} parent=19 // pred_region
        %s161 = smul.u32 8, %s11
        %p162 = scmp.lt.s32.totalorder %s161, 15
        %s163 = scalar_select %p162, %s161, 15
        %s164 = smul.addr %s163, 8
        %s165 = scalar_lea.vmem %s0, %s164
        %s166 = smul.u32 8, %s11
      $region24: #{d1_forward.6} parent=19 // pred_fallthru
        _
    $region20: #{d1_forward.6} parent=5 // pred_fallthru
      _
    %p167 = scmp.le.s32.totalorder 1, %s11
    %p168 = scmp.lt.s32.totalorder %s11, 3
    %p169 = pnand %p167, %p168
    %p170 = pneg %p169
    // Predicated region
    $region25: #{d1_forward.6} parent=5 // pred_check
      _
    $region26: #{d1_forward.6} parent=5 // pred_check_branch
      %172 = sbr.rel (%p169) target = $region28
    $region27: #{d1_forward.6} parent=5 // pred_region
      %s173 = ssub.s32 %s11, 1
      %s174 = smul.u32 8, %s16
      %p175 = scmp.lt.s32.totalorder %s174, 15
      %s176 = scalar_select %p175, %s174, 15
      %s177 = smul.addr %s176, 8
      %s178 = scalar_lea.vmem %s0, %s177
      %p179 = pneg %p37
      %p180 = pneg %p34
      %p181 = pneg %p58
      %p182 = pneg %p55
      %p183 = pneg %p84
      %p184 = pneg %p81
      %s185 = smul.u32 8, %s16
      %p186 = scmp.lt.s32.totalorder %s185, 15
      %s187 = scalar_select %p186, %s185, 15
      %s188 = smul.addr %s187, 8
      %s189 = scalar_lea.vmem %s2, %s188
      %p190 = pneg %p110
      %p191 = pneg %p107
      %p192 = scmp.lt.s32.totalorder %s16, 1
      %s193 = scalar_select %p192, %s16, 1
      %s194 = scalar_lea.vmem %s3, %s193
      %p195 = pneg %p136
      %p196 = pneg %p133
      %p197 = scmp.lt.s32.totalorder %s16, 1
      %s198 = scalar_select %p197, %s16, 1
      %s199 = scalar_lea.vmem %s4, %s198
      %s200 = smul.u32 8, %s16
      %p201 = scmp.lt.s32.totalorder %s200, 15
      %s202 = scalar_select %p201, %s200, 15
      %s203 = smul.addr %s202, 8
      %s204 = scalar_lea.vmem %s0, %s203
      %s205 = smul.u32 8, %s16
      %s206 = smul.u32 8, %s16
      %p207 = scmp.lt.s32.totalorder %s206, 15
      %s208 = scalar_select %p207, %s206, 15
      %s209 = smul.addr %s208, 8
      %s210 = scalar_lea.vmem %s2, %s209
      %s211 = smul.u32 8, %s16
      %p212 = scmp.lt.s32.totalorder %s16, 1
      %s213 = scalar_select %p212, %s16, 1
      %s214 = scalar_lea.vmem %s3, %s213
      %p215 = scmp.lt.s32.totalorder %s16, 1
      %s216 = scalar_select %p215, %s16, 1
      %s217 = scalar_lea.vmem %s4, %s216
      %v218 = vld [vmem:[%s204] sm:$0xff]
      %v219 = vld [vmem:[%s204 + $0x8] sm:$0xff]
      %v220 = vld [vmem:[%s204 + $0x10] sm:$0xff]
      %v221 = vld [vmem:[%s204 + $0x18] sm:$0xff]
      %v222 = vld [vmem:[%s204 + $0x20] sm:$0xff]
      %v223 = vld [vmem:[%s204 + $0x28] sm:$0xff]
      %v224 = vld [vmem:[%s204 + $0x30] sm:$0xff]
      %v225 = vld [vmem:[%s204 + $0x38] sm:$0xff]
      %v226 = vld [vmem:[%s1] sm:$0xff]
      %v227 = vld [vmem:[%s1 + $0x8] sm:$0xff]
      %v228 = vld [vmem:[%s1 + $0x10] sm:$0xff]
      %v229 = vld [vmem:[%s1 + $0x18] sm:$0xff]
      %v230 = vld [vmem:[%s1 + $0x20] sm:$0xff]
      %v231 = vld [vmem:[%s1 + $0x28] sm:$0xff]
      %v232 = vld [vmem:[%s1 + $0x30] sm:$0xff]
      %v233 = vld [vmem:[%s1 + $0x38] sm:$0xff]
      %v234 = vld [vmem:[%s1 + $0x40] sm:$0xff]
      %v235 = vld [vmem:[%s1 + $0x48] sm:$0xff]
      %v236 = vld [vmem:[%s1 + $0x50] sm:$0xff]
      %v237 = vld [vmem:[%s1 + $0x58] sm:$0xff]
      %v238 = vld [vmem:[%s1 + $0x60] sm:$0xff]
      %v239 = vld [vmem:[%s1 + $0x68] sm:$0xff]
      %v240 = vld [vmem:[%s1 + $0x70] sm:$0xff]
      %v241 = vld [vmem:[%s1 + $0x78] sm:$0xff]
      %242 = vmatprep.subr.mxu0 0.0
      %243 = vmatpush1.msra.mxu0 %v226
      %244 = vmatprep.subr.mxu0 0.0
      %245 = vmatpush1.msra.mxu0 %v227
      %246 = vmatprep.subr.mxu0 0.0
      %247 = vmatpush1.msra.mxu0 %v228
      %248 = vmatprep.subr.mxu0 0.0
      %249 = vmatpush1.msra.mxu0 %v229
      %250 = vmatprep.subr.mxu0 0.0
      %251 = vmatpush1.msra.mxu0 %v230
      %252 = vmatprep.subr.mxu0 0.0
      %253 = vmatpush1.msra.mxu0 %v231
      %254 = vmatprep.subr.mxu0 0.0
      %255 = vmatpush1.msra.mxu0 %v232
      %256 = vmatprep.subr.mxu0 0.0
      %257 = vmatpush1.msra.mxu0 %v233
      %258 = vmatprep.subr.mxu0 0.0
      %259 = vmatpush1.msra.mxu0 %v234
      %260 = vmatprep.subr.mxu0 0.0
      %261 = vmatpush1.msra.mxu0 %v235
      %262 = vmatprep.subr.mxu0 0.0
      %263 = vmatpush1.msra.mxu0 %v236
      %264 = vmatprep.subr.mxu0 0.0
      %265 = vmatpush1.msra.mxu0 %v237
      %266 = vmatprep.subr.mxu0 0.0
      %267 = vmatpush1.msra.mxu0 %v238
      %268 = vmatprep.subr.mxu0 0.0
      %269 = vmatpush1.msra.mxu0 %v239
      %270 = vmatprep.subr.mxu0 0.0
      %271 = vmatpush1.msra.mxu0 %v240
      %272 = vmatprep.subr.mxu0 0.0
      %273 = vmatpush1.msra.mxu0 %v241
      %274 = vmatprep.subr.mxu0 0.0
      %275 = vmatpush1.msra.mxu0 0.0
      %276 = vmatprep.subr.mxu0 0.0
      %277 = vmatpush1.msra.mxu0 0.0
      %278 = vmatprep.subr.mxu0 0.0
      %279 = vmatpush1.msra.mxu0 0.0
      %280 = vmatprep.subr.mxu0 0.0
      %281 = vmatpush1.msra.mxu0 0.0
      %282 = vmatprep.subr.mxu0 0.0
      %283 = vmatpush1.msra.mxu0 0.0
      %284 = vmatprep.subr.mxu0 0.0
      %285 = vmatpush1.msra.mxu0 0.0
      %286 = vmatprep.subr.mxu0 0.0
      %287 = vmatpush1.msra.mxu0 0.0
      %288 = vmatprep.subr.mxu0 0.0
      %289 = vmatpush1.msra.mxu0 0.0
      %290 = vmatprep.subr.mxu0 0.0
      %291 = vmatpush1.msra.mxu0 0.0
      %292 = vmatprep.subr.mxu0 0.0
      %293 = vmatpush1.msra.mxu0 0.0
      %294 = vmatprep.subr.mxu0 0.0
      %295 = vmatpush1.msra.mxu0 0.0
      %296 = vmatprep.subr.mxu0 0.0
      %297 = vmatpush1.msra.mxu0 0.0
      %298 = vmatprep.subr.mxu0 0.0
      %299 = vmatpush1.msra.mxu0 0.0
      %300 = vmatprep.subr.mxu0 0.0
      %301 = vmatpush1.msra.mxu0 0.0
      %302 = vmatprep.subr.mxu0 0.0
      %303 = vmatpush1.msra.mxu0 0.0
      %304 = vmatprep.subr.mxu0 0.0
      %305 = vmatpush1.msra.mxu0 0.0
      %306 = vmatprep.mubr.f32.mxu0 0.0
      %307 = vmatmul.mubr.f32.gmra.mrb[0].mxu0 %v218
      %v308 = vpop.f32.mrb[0].mxu0
      %v309 = vadd.f32 0.0, %v308
      %v310 = vpop.f32.mrb[0].mxu0
      %311 = vmatprep.mubr.f32.mxu0 0.0
      %312 = vmatmul.mubr.f32.gmra.mrb[0].mxu0 %v219
      %v313 = vpop.f32.mrb[0].mxu0
      %v314 = vadd.f32 0.0, %v313
      %v315 = vpop.f32.mrb[0].mxu0
      %316 = vmatprep.mubr.f32.mxu0 0.0
      %317 = vmatmul.mubr.f32.gmra.mrb[0].mxu0 %v220
      %v318 = vpop.f32.mrb[0].mxu0
      %v319 = vadd.f32 0.0, %v318
      %v320 = vpop.f32.mrb[0].mxu0
      %321 = vmatprep.mubr.f32.mxu0 0.0
      %322 = vmatmul.mubr.f32.gmra.mrb[0].mxu0 %v221
      %v323 = vpop.f32.mrb[0].mxu0
      %v324 = vadd.f32 0.0, %v323
      %v325 = vpop.f32.mrb[0].mxu0
      %326 = vmatprep.mubr.f32.mxu0 0.0
      %327 = vmatmul.mubr.f32.gmra.mrb[0].mxu0 %v222
      %v328 = vpop.f32.mrb[0].mxu0
      %v329 = vadd.f32 0.0, %v328
      %v330 = vpop.f32.mrb[0].mxu0
      %331 = vmatprep.mubr.f32.mxu0 0.0
      %332 = vmatmul.mubr.f32.gmra.mrb[0].mxu0 %v223
      %v333 = vpop.f32.mrb[0].mxu0
      %v334 = vadd.f32 0.0, %v333
      %v335 = vpop.f32.mrb[0].mxu0
      %336 = vmatprep.mubr.f32.mxu0 0.0
      %337 = vmatmul.mubr.f32.gmra.mrb[0].mxu0 %v224
      %v338 = vpop.f32.mrb[0].mxu0
      %v339 = vadd.f32 0.0, %v338
      %v340 = vpop.f32.mrb[0].mxu0
      %341 = vmatprep.mubr.f32.mxu0 0.0
      %342 = vmatmul.mubr.f32.gmra.mrb[0].mxu0 %v225
      %v343 = vpop.f32.mrb[0].mxu0
      %v344 = vadd.f32 0.0, %v343
      %v345 = vpop.f32.mrb[0].mxu0
      %346 = vdwg.mxu0
      %347 = vst [vmem:[%s210] sm:$0xff] %v309
      %348 = vst [vmem:[%s210 + $0x8] sm:$0xff] %v314
      %349 = vst [vmem:[%s210 + $0x10] sm:$0xff] %v319
      %350 = vst [vmem:[%s210 + $0x18] sm:$0xff] %v324
      %351 = vst [vmem:[%s210 + $0x20] sm:$0xff] %v329
      %352 = vst [vmem:[%s210 + $0x28] sm:$0xff] %v334
      %353 = vst [vmem:[%s210 + $0x30] sm:$0xff] %v339
      %354 = vst [vmem:[%s210 + $0x38] sm:$0xff] %v344
      %s355 = smul.u32 %s16, 64
      %s356 = ssub.s32 128, %s355
      %p357 = scmp.lt.s32.totalorder %s356, 64
      %s358 = scalar_select %p357, %s356, 64
      %v359 = vadd.f32 %v309, %v314
      %v360 = vadd.f32 %v359, %v319
      %v361 = vadd.f32 %v360, %v324
      %v362 = vadd.f32 %v361, %v329
      %v363 = vadd.f32 %v362, %v334
      %v364 = vadd.f32 %v363, %v339
      %v365 = vadd.f32 %v364, %v344
      %v366 = vrot.slane %v365, 4
      %v367 = vadd.f32 %v365, %v366
      %v368 = vrot.slane %v367, 2
      %v369 = vadd.f32 %v367, %v368
      %v370 = vrot.slane %v369, 1
      %v371 = vadd.f32 %v369, %v370
      %s372 = scvt.s32.f32 %s358
      %v373 = vstv %s372
      %v374 = vrcp.pop %v373
      %s375 = vtos %v374
      %v376 = vstv %s375
      %v377 = vmul.f32 %v371, %v376
      %v378 = vlaneseq
      %v379 = vshrl.u32 %v378, 7
      %v380 = vadd.s32 %v379, 8
      %v381 = vadd.s32 %v379, 16
      %v382 = vadd.s32 %v379, 24
      %v383 = vadd.s32 %v379, 32
      %v384 = vadd.s32 %v379, 40
      %v385 = vadd.s32 %v379, 48
      %v386 = vadd.s32 %v379, 56
      %v387 = vstv %s358
      %vm388 = vcmp.lt.s32.totalorder %v379, %v387
      %vm389 = vcmp.lt.s32.totalorder %v380, %v387
      %vm390 = vcmp.lt.s32.totalorder %v381, %v387
      %vm391 = vcmp.lt.s32.totalorder %v382, %v387
      %vm392 = vcmp.lt.s32.totalorder %v383, %v387
      %vm393 = vcmp.lt.s32.totalorder %v384, %v387
      %vm394 = vcmp.lt.s32.totalorder %v385, %v387
      %vm395 = vcmp.lt.s32.totalorder %v386, %v387
      %v396 = vsub.f32 %v309, %v377
      %v397 = vsub.f32 %v314, %v377
      %v398 = vsub.f32 %v319, %v377
      %v399 = vsub.f32 %v324, %v377
      %v400 = vsub.f32 %v329, %v377
      %v401 = vsub.f32 %v334, %v377
      %v402 = vsub.f32 %v339, %v377
      %v403 = vsub.f32 %v344, %v377
      %v404 = vsel %vm388, 1, 0
      %v405 = vsel %vm389, 1, 0
      %v406 = vsel %vm390, 1, 0
      %v407 = vsel %vm391, 1, 0
      %v408 = vsel %vm392, 1, 0
      %v409 = vsel %vm393, 1, 0
      %v410 = vsel %vm394, 1, 0
      %v411 = vsel %vm395, 1, 0
      %vm412 = vcmp.eq.s32.totalorder %v404, 1
      %vm413 = vcmp.eq.s32.totalorder %v405, 1
      %vm414 = vcmp.eq.s32.totalorder %v406, 1
      %vm415 = vcmp.eq.s32.totalorder %v407, 1
      %vm416 = vcmp.eq.s32.totalorder %v408, 1
      %vm417 = vcmp.eq.s32.totalorder %v409, 1
      %vm418 = vcmp.eq.s32.totalorder %v410, 1
      %vm419 = vcmp.eq.s32.totalorder %v411, 1
      %v420 = vsel %vm412, %v396, 0.0
      %v421 = vsel %vm413, %v397, 0.0
      %v422 = vsel %vm414, %v398, 0.0
      %v423 = vsel %vm415, %v399, 0.0
      %v424 = vsel %vm416, %v400, 0.0
      %v425 = vsel %vm417, %v401, 0.0
      %v426 = vsel %vm418, %v402, 0.0
      %v427 = vsel %vm419, %v403, 0.0
      %428 = vst [vmem:[%s214] sm:$0x1] %v371
      %v429 = vmul.f32 %v420, %v420
      %v430 = vmul.f32 %v421, %v421
      %v431 = vmul.f32 %v422, %v422
      %v432 = vmul.f32 %v423, %v423
      %v433 = vmul.f32 %v424, %v424
      %v434 = vmul.f32 %v425, %v425
      %v435 = vmul.f32 %v426, %v426
      %v436 = vmul.f32 %v427, %v427
      %v437 = vadd.f32 %v429, %v430
      %v438 = vadd.f32 %v437, %v431
      %v439 = vadd.f32 %v438, %v432
      %v440 = vadd.f32 %v439, %v433
      %v441 = vadd.f32 %v440, %v434
      %v442 = vadd.f32 %v441, %v435
      %v443 = vadd.f32 %v442, %v436
      %v444 = vrot.slane %v443, 4
      %v445 = vadd.f32 %v443, %v444
      %v446 = vrot.slane %v445, 2
      %v447 = vadd.f32 %v445, %v446
      %v448 = vrot.slane %v447, 1
      %v449 = vadd.f32 %v447, %v448
      %450 = vst [vmem:[%s217] sm:$0x1] %v449
      %s451 = smul.u32 8, %s16
      %p452 = scmp.lt.s32.totalorder %s451, 15
      %s453 = scalar_select %p452, %s451, 15
      %s454 = smul.addr %s453, 8
      %s455 = scalar_lea.vmem %s2, %s454
      %p456 = scmp.lt.s32.totalorder %s16, 1
      %s457 = scalar_select %p456, %s16, 1
      %s458 = scalar_lea.vmem %s3, %s457
      %p459 = scmp.lt.s32.totalorder %s16, 1
      %s460 = scalar_select %p459, %s16, 1
      %s461 = scalar_lea.vmem %s4, %s460
      // Predicated region
      $region29: #{d1_forward.6} parent=27 // pred_check
        %p462 = pneg %p81
      $region30: #{d1_forward.6} parent=27 // pred_check_branch
        %464 = sbr.rel (%p462) target = $region32
      $region31: #{d1_forward.6} parent=27 // pred_region
        %s465 = smul.u32 8, %s16
      $region32: #{d1_forward.6} parent=27 // pred_fallthru
        _
      // Predicated region
      $region33: #{d1_forward.6} parent=27 // pred_check
        %p466 = pneg %p107
      $region34: #{d1_forward.6} parent=27 // pred_check_branch
        %468 = sbr.rel (%p466) target = $region36
      $region35: #{d1_forward.6} parent=27 // pred_region
        _
      $region36: #{d1_forward.6} parent=27 // pred_fallthru
        _
      // Predicated region
      $region37: #{d1_forward.6} parent=27 // pred_check
        %p469 = pneg %p133
      $region38: #{d1_forward.6} parent=27 // pred_check_branch
        %471 = sbr.rel (%p469) target = $region40
      $region39: #{d1_forward.6} parent=27 // pred_region
        _
      $region40: #{d1_forward.6} parent=27 // pred_fallthru
        _
    $region28: #{d1_forward.6} parent=5 // pred_fallthru
      _
    %p472 = scmp.le.s32.totalorder 2, %s11
    // Predicated region
    $region41: #{d1_forward.6} parent=5 // pred_check
      %p473 = pneg %p472
    $region42: #{d1_forward.6} parent=5 // pred_check_branch
      %475 = sbr.rel (%p473) target = $region44
    $region43: #{d1_forward.6} parent=5 // pred_region
      %s476 = ssub.s32 %s11, 2
      // Predicated region
      $region45: #{d1_forward.6} parent=43 // pred_check
        %p477 = pneg %p87
      $region46: #{d1_forward.6} parent=43 // pred_check_branch
        %479 = sbr.rel (%p477) target = $region48
      $region47: #{d1_forward.6} parent=43 // pred_region
        %s480 = smul.u32 8, %s17
        %p481 = scmp.lt.s32.totalorder %s480, 15
        %s482 = scalar_select %p481, %s480, 15
        %s483 = smul.addr %s482, 8
        %s484 = scalar_lea.vmem %s2, %s483
      $region48: #{d1_forward.6} parent=43 // pred_fallthru
        _
      // Predicated region
      $region49: #{d1_forward.6} parent=43 // pred_check
        %p485 = pneg %p113
      $region50: #{d1_forward.6} parent=43 // pred_check_branch
        %487 = sbr.rel (%p485) target = $region52
      $region51: #{d1_forward.6} parent=43 // pred_region
        %p488 = scmp.lt.s32.totalorder %s17, 1
        %s489 = scalar_select %p488, %s17, 1
        %s490 = scalar_lea.vmem %s3, %s489
      $region52: #{d1_forward.6} parent=43 // pred_fallthru
        _
      // Predicated region
      $region53: #{d1_forward.6} parent=43 // pred_check
        %p491 = pneg %p139
      $region54: #{d1_forward.6} parent=43 // pred_check_branch
        %493 = sbr.rel (%p491) target = $region56
      $region55: #{d1_forward.6} parent=43 // pred_region
        %p494 = scmp.lt.s32.totalorder %s17, 1
        %s495 = scalar_select %p494, %s17, 1
        %s496 = scalar_lea.vmem %s4, %s495
      $region56: #{d1_forward.6} parent=43 // pred_fallthru
        _
    $region44: #{d1_forward.6} parent=5 // pred_fallthru
      _
  $region6: #{d1_forward.6} parent=0 // loop_footer
    %s15 = sadd.s32 1, %s11
  $region7: #{d1_forward.6} parent=0 // loop_footer_branch
    %10 = sbr.rel target = $region3
  $region8: #{d1_forward.6} parent=0 // loop_exit
    _

// kernel: d1_forward.7
$region0: #{d1_forward.7}
  #allocation0 [shape = 'u32[]', space=smem, size = 0x4, offset = 0x4, fixed_abs, tag = 'smem constant byte address 0x4 - core index']
  #allocation1 [shape = 'u32[144,128]{1,0:T(1,128)}', space=vmem, size = 0x12000, scoped, tag = 'internal scratch']
  %s0 = inlined_call_operand.vmem [shape: f32[128,128], index: 0, kind: input, shape index: {}]
  %s1 = inlined_call_operand.vmem [shape: f32[1,128], index: 1, kind: input, shape index: {}]
  %s2 = inlined_call_operand.vmem [shape: f32[1,128], index: 2, kind: input, shape index: {}]
  %s3 = inlined_call_operand.vmem [shape: f32[128,128], index: 3, kind: output, shape index: {}]
  %s4 = sld [smem:[#allocation0]]
  $region22: #{d1_forward.7} parent=0
    _
  %s6 = ssub.s32 1, %s4
  %s7 = scalar_select 0, %s6, %s4
  // Predicated region
  $region2: #{d1_forward.7} parent=0 // pred_check
    _
  $region3: #{d1_forward.7} parent=0 // pred_check_branch
    %9 = sbr.rel (0) target = $region5
  $region4: #{d1_forward.7} parent=0 // pred_region
    _
  $region5: #{d1_forward.7} parent=0 // pred_fallthru
    _
  // Predicated region
  $region6: #{d1_forward.7} parent=0 // pred_check
    _
  $region7: #{d1_forward.7} parent=0 // pred_check_branch
    %11 = sbr.rel (0) target = $region9
  $region8: #{d1_forward.7} parent=0 // pred_region
    _
  $region9: #{d1_forward.7} parent=0 // pred_fallthru
    _
  // Predicated region
  $region10: #{d1_forward.7} parent=0 // pred_check
    _
  $region11: #{d1_forward.7} parent=0 // pred_check_branch
    %13 = sbr.rel (0) target = $region13
  $region12: #{d1_forward.7} parent=0 // pred_region
    _
  $region13: #{d1_forward.7} parent=0 // pred_fallthru
    _
  %v14 = vld [vmem:[%s0] sm:$0xff]
  %v15 = vld [vmem:[%s0 + $0x8] sm:$0xff]
  %v16 = vld [vmem:[%s0 + $0x10] sm:$0xff]
  %v17 = vld [vmem:[%s0 + $0x18] sm:$0xff]
  %v18 = vld [vmem:[%s0 + $0x20] sm:$0xff]
  %v19 = vld [vmem:[%s0 + $0x28] sm:$0xff]
  %v20 = vld [vmem:[%s0 + $0x30] sm:$0xff]
  %v21 = vld [vmem:[%s0 + $0x38] sm:$0xff]
  %v22 = vld [vmem:[%s0 + $0x40] sm:$0xff]
  %v23 = vld [vmem:[%s0 + $0x48] sm:$0xff]
  %v24 = vld [vmem:[%s0 + $0x50] sm:$0xff]
  %v25 = vld [vmem:[%s0 + $0x58] sm:$0xff]
  %v26 = vld [vmem:[%s0 + $0x60] sm:$0xff]
  %v27 = vld [vmem:[%s0 + $0x68] sm:$0xff]
  %v28 = vld [vmem:[%s0 + $0x70] sm:$0xff]
  %v29 = vld [vmem:[%s0 + $0x78] sm:$0xff]
  %v30 = vld [vmem:[%s1] sm:$0x1]
  %v32 = vlaneseq
  %v33 = vshrl.u32 %v32, 7
  %v34 = vsub.s32 0, %v33
  %v35 = vrot.slane %v30, %v34
  %v37 = vmul.f32 %v14, %v35
  %v38 = vmul.f32 %v15, %v35
  %v39 = vmul.f32 %v16, %v35
  %v40 = vmul.f32 %v17, %v35
  %v41 = vmul.f32 %v18, %v35
  %v42 = vmul.f32 %v19, %v35
  %v43 = vmul.f32 %v20, %v35
  %v44 = vmul.f32 %v21, %v35
  %v45 = vmul.f32 %v22, %v35
  %v46 = vmul.f32 %v23, %v35
  %v47 = vmul.f32 %v24, %v35
  %v48 = vmul.f32 %v25, %v35
  %v49 = vmul.f32 %v26, %v35
  %v50 = vmul.f32 %v27, %v35
  %v51 = vmul.f32 %v28, %v35
  %v52 = vmul.f32 %v29, %v35
  %v53 = vld [vmem:[%s2] sm:$0x1]
  %v55 = vlaneseq
  %v56 = vshrl.u32 %v55, 7
  %v57 = vsub.s32 0, %v56
  %v58 = vrot.slane %v53, %v57
  %v60 = vadd.f32 %v37, %v58
  %v61 = vadd.f32 %v38, %v58
  %v62 = vadd.f32 %v39, %v58
  %v63 = vadd.f32 %v40, %v58
  %v64 = vadd.f32 %v41, %v58
  %v65 = vadd.f32 %v42, %v58
  %v66 = vadd.f32 %v43, %v58
  %v67 = vadd.f32 %v44, %v58
  %v68 = vadd.f32 %v45, %v58
  %v69 = vadd.f32 %v46, %v58
  %v70 = vadd.f32 %v47, %v58
  %v71 = vadd.f32 %v48, %v58
  %v72 = vadd.f32 %v49, %v58
  %v73 = vadd.f32 %v50, %v58
  %v74 = vadd.f32 %v51, %v58
  %v75 = vadd.f32 %v52, %v58
  %vm76 = vcmp.ge.f32.partialorder %v60, 0.0
  %vm77 = vcmp.ge.f32.partialorder %v61, 0.0
  %vm78 = vcmp.ge.f32.partialorder %v62, 0.0
  %vm79 = vcmp.ge.f32.partialorder %v63, 0.0
  %vm80 = vcmp.ge.f32.partialorder %v64, 0.0
  %vm81 = vcmp.ge.f32.partialorder %v65, 0.0
  %vm82 = vcmp.ge.f32.partialorder %v66, 0.0
  %vm83 = vcmp.ge.f32.partialorder %v67, 0.0
  %vm84 = vcmp.ge.f32.partialorder %v68, 0.0
  %vm85 = vcmp.ge.f32.partialorder %v69, 0.0
  %vm86 = vcmp.ge.f32.partialorder %v70, 0.0
  %vm87 = vcmp.ge.f32.partialorder %v71, 0.0
  %vm88 = vcmp.ge.f32.partialorder %v72, 0.0
  %vm89 = vcmp.ge.f32.partialorder %v73, 0.0
  %vm90 = vcmp.ge.f32.partialorder %v74, 0.0
  %vm91 = vcmp.ge.f32.partialorder %v75, 0.0
  %v92 = vmul.f32 %v60, 0.05
  %v93 = vmul.f32 %v61, 0.05
  %v94 = vmul.f32 %v62, 0.05
  %v95 = vmul.f32 %v63, 0.05
  %v96 = vmul.f32 %v64, 0.05
  %v97 = vmul.f32 %v65, 0.05
  %v98 = vmul.f32 %v66, 0.05
  %v99 = vmul.f32 %v67, 0.05
  %v100 = vmul.f32 %v68, 0.05
  %v101 = vmul.f32 %v69, 0.05
  %v102 = vmul.f32 %v70, 0.05
  %v103 = vmul.f32 %v71, 0.05
  %v104 = vmul.f32 %v72, 0.05
  %v105 = vmul.f32 %v73, 0.05
  %v106 = vmul.f32 %v74, 0.05
  %v107 = vmul.f32 %v75, 0.05
  %v108 = vsel %vm76, %v60, %v92
  %v109 = vsel %vm77, %v61, %v93
  %v110 = vsel %vm78, %v62, %v94
  %v111 = vsel %vm79, %v63, %v95
  %v112 = vsel %vm80, %v64, %v96
  %v113 = vsel %vm81, %v65, %v97
  %v114 = vsel %vm82, %v66, %v98
  %v115 = vsel %vm83, %v67, %v99
  %v116 = vsel %vm84, %v68, %v100
  %v117 = vsel %vm85, %v69, %v101
  %v118 = vsel %vm86, %v70, %v102
  %v119 = vsel %vm87, %v71, %v103
  %v120 = vsel %vm88, %v72, %v104
  %v121 = vsel %vm89, %v73, %v105
  %v122 = vsel %vm90, %v74, %v106
  %v123 = vsel %vm91, %v75, %v107
  %124 = vst [vmem:[%s3] sm:$0xff] %v108
  %125 = vst [vmem:[%s3 + $0x8] sm:$0xff] %v109
  %126 = vst [vmem:[%s3 + $0x10] sm:$0xff] %v110
  %127 = vst [vmem:[%s3 + $0x18] sm:$0xff] %v111
  %128 = vst [vmem:[%s3 + $0x20] sm:$0xff] %v112
  %129 = vst [vmem:[%s3 + $0x28] sm:$0xff] %v113
  %130 = vst [vmem:[%s3 + $0x30] sm:$0xff] %v114
  %131 = vst [vmem:[%s3 + $0x38] sm:$0xff] %v115
  %132 = vst [vmem:[%s3 + $0x40] sm:$0xff] %v116
  %133 = vst [vmem:[%s3 + $0x48] sm:$0xff] %v117
  %134 = vst [vmem:[%s3 + $0x50] sm:$0xff] %v118
  %135 = vst [vmem:[%s3 + $0x58] sm:$0xff] %v119
  %136 = vst [vmem:[%s3 + $0x60] sm:$0xff] %v120
  %137 = vst [vmem:[%s3 + $0x68] sm:$0xff] %v121
  %138 = vst [vmem:[%s3 + $0x70] sm:$0xff] %v122
  %139 = vst [vmem:[%s3 + $0x78] sm:$0xff] %v123
  // Predicated region
  $region14: #{d1_forward.7} parent=0 // pred_check
    _
  $region15: #{d1_forward.7} parent=0 // pred_check_branch
    %141 = sbr.rel (0) target = $region17
  $region16: #{d1_forward.7} parent=0 // pred_region
    _
  $region17: #{d1_forward.7} parent=0 // pred_fallthru
    _
  // Predicated region
  $region18: #{d1_forward.7} parent=0 // pred_check
    _
  $region19: #{d1_forward.7} parent=0 // pred_check_branch
    %143 = sbr.rel (0) target = $region21
  $region20: #{d1_forward.7} parent=0 // pred_region
    _
  $region21: #{d1_forward.7} parent=0 // pred_fallthru
    _

// kernel: d1_forward.9
$region0: #{d1_forward.9}
  #allocation0 [shape = 'u32[]', space=smem, size = 0x4, offset = 0x4, fixed_abs, tag = 'smem constant byte address 0x4 - core index']
  #allocation1 [shape = 'u32[144,128]{1,0:T(1,128)}', space=vmem, size = 0x12000, scoped, tag = 'internal scratch']
  %s0 = inlined_call_operand.vmem [shape: f32[32,128], index: 0, kind: input, shape index: {}]
  %s1 = inlined_call_operand.vmem [shape: f32[1,128], index: 1, kind: input, shape index: {}]
  %s2 = inlined_call_operand.vmem [shape: f32[1,128], index: 2, kind: input, shape index: {}]
  %s3 = inlined_call_operand.vmem [shape: f32[32,128], index: 3, kind: output, shape index: {}]
  %s4 = sld [smem:[#allocation0]]
  $region22: #{d1_forward.9} parent=0
    _
  %s6 = ssub.s32 1, %s4
  %s7 = scalar_select 0, %s6, %s4
  // Predicated region
  $region2: #{d1_forward.9} parent=0 // pred_check
    _
  $region3: #{d1_forward.9} parent=0 // pred_check_branch
    %9 = sbr.rel (0) target = $region5
  $region4: #{d1_forward.9} parent=0 // pred_region
    _
  $region5: #{d1_forward.9} parent=0 // pred_fallthru
    _
  // Predicated region
  $region6: #{d1_forward.9} parent=0 // pred_check
    _
  $region7: #{d1_forward.9} parent=0 // pred_check_branch
    %11 = sbr.rel (0) target = $region9
  $region8: #{d1_forward.9} parent=0 // pred_region
    _
  $region9: #{d1_forward.9} parent=0 // pred_fallthru
    _
  // Predicated region
  $region10: #{d1_forward.9} parent=0 // pred_check
    _
  $region11: #{d1_forward.9} parent=0 // pred_check_branch
    %13 = sbr.rel (0) target = $region13
  $region12: #{d1_forward.9} parent=0 // pred_region
    _
  $region13: #{d1_forward.9} parent=0 // pred_fallthru
    _
  %v14 = vld [vmem:[%s0] sm:$0xff]
  %v15 = vld [vmem:[%s0 + $0x8] sm:$0xff]
  %v16 = vld [vmem:[%s0 + $0x10] sm:$0xff]
  %v17 = vld [vmem:[%s0 + $0x18] sm:$0xff]
  %v18 = vld [vmem:[%s1] sm:$0x1]
  %v20 = vlaneseq
  %v21 = vshrl.u32 %v20, 7
  %v22 = vsub.s32 0, %v21
  %v23 = vrot.slane %v18, %v22
  %v25 = vmul.f32 %v14, %v23
  %v26 = vmul.f32 %v15, %v23
  %v27 = vmul.f32 %v16, %v23
  %v28 = vmul.f32 %v17, %v23
  %v29 = vld [vmem:[%s2] sm:$0x1]
  %v31 = vlaneseq
  %v32 = vshrl.u32 %v31, 7
  %v33 = vsub.s32 0, %v32
  %v34 = vrot.slane %v29, %v33
  %v36 = vadd.f32 %v25, %v34
  %v37 = vadd.f32 %v26, %v34
  %v38 = vadd.f32 %v27, %v34
  %v39 = vadd.f32 %v28, %v34
  %vm40 = vcmp.ge.f32.partialorder %v36, 0.0
  %vm41 = vcmp.ge.f32.partialorder %v37, 0.0
  %vm42 = vcmp.ge.f32.partialorder %v38, 0.0
  %vm43 = vcmp.ge.f32.partialorder %v39, 0.0
  %v44 = vmul.f32 %v36, 0.05
  %v45 = vmul.f32 %v37, 0.05
  %v46 = vmul.f32 %v38, 0.05
  %v47 = vmul.f32 %v39, 0.05
  %v48 = vsel %vm40, %v36, %v44
  %v49 = vsel %vm41, %v37, %v45
  %v50 = vsel %vm42, %v38, %v46
  %v51 = vsel %vm43, %v39, %v47
  %52 = vst [vmem:[%s3] sm:$0xff] %v48
  %53 = vst [vmem:[%s3 + $0x8] sm:$0xff] %v49
  %54 = vst [vmem:[%s3 + $0x10] sm:$0xff] %v50
  %55 = vst [vmem:[%s3 + $0x18] sm:$0xff] %v51
  // Predicated region
  $region14: #{d1_forward.9} parent=0 // pred_check
    _
  $region15: #{d1_forward.9} parent=0 // pred_check_branch
    %57 = sbr.rel (0) target = $region17
  $region16: #{d1_forward.9} parent=0 // pred_region
    _
  $region17: #{d1_forward.9} parent=0 // pred_fallthru
    _
  // Predicated region
  $region18: #{d1_forward.9} parent=0 // pred_check
    _
  $region19: #{d1_forward.9} parent=0 // pred_check_branch
    %59 = sbr.rel (0) target = $region21
  $region20: #{d1_forward.9} parent=0 // pred_region
    _
  $region21: #{d1_forward.9} parent=0 // pred_fallthru
    _

// kernel: d1_forward.8
$region0: #{d1_forward.8}
  #allocation0 [shape = 'u32[]', space=smem, size = 0x4, offset = 0x4, fixed_abs, tag = 'smem constant byte address 0x4 - core index']
  #allocation1 [shape = 'u32[144,128]{1,0:T(1,128)}', space=vmem, size = 0x12000, scoped, tag = 'internal scratch']
  %s0 = inlined_call_operand.vmem [shape: f32[32,256], index: 0, kind: input, shape index: {}]
  %s1 = inlined_call_operand.vmem [shape: f32[256,128], index: 1, kind: input, shape index: {}]
  %s2 = inlined_call_operand.vmem [shape: f32[32,128], index: 2, kind: output, shape index: {0}]
  %s3 = inlined_call_operand.vmem [shape: f32[2,1,128], index: 3, kind: output, shape index: {1}]
  %s4 = inlined_call_operand.vmem [shape: f32[2,1,128], index: 4, kind: output, shape index: {2}]
  %5 = xla_tuple %s2, %s3, %s4
  %s6 = sld [smem:[#allocation0]]
  $region57: #{d1_forward.8} parent=0
    _
  %s8 = ssub.s32 1, %s6
  %s9 = scalar_select 0, %s8, %s6
  loop: start=0, step=1, limit=4
  $region2: #{d1_forward.8} parent=0 // loop_pre_header
    _
  $region3: #{d1_forward.8} parent=0 // loop_header
    %s11 = sphi 0, %s15
    %p12 = scmp.ge.s32.totalorder %s11, 4
    %s21 = sphi 0, %s23
    %s24 = sphi 0, %s21
    %s25 = sphi 0, %s24
    %s41 = sphi 0, %s25
    %s45 = sphi 0, %s45
    %s47 = sphi 0, %s45
    %s48 = sphi 0, %s47
    %s62 = sphi 0, %s48
    %s68 = sphi 0, %s70
    %s71 = sphi 0, %s68
    %s72 = sphi 0, %s71
    %s88 = sphi 0, %s72
    %s94 = sphi 0, %s96
    %s97 = sphi 0, %s94
    %s98 = sphi 0, %s97
    %s114 = sphi 0, %s98
    %s120 = sphi 0, %s122
    %s123 = sphi 0, %s120
    %s124 = sphi 0, %s123
    %s140 = sphi 0, %s124
  $region4: #{d1_forward.8} parent=0 // loop_header_branch
    %14 = sbr.rel (%p12) target = $region8
  $region5: #{d1_forward.8} parent=0 // loop_body
    %s16 = ssub.s32 %s11, 1
    %s17 = ssub.s32 %s11, 2
    %s18 = sadd.s32 %s11, 1
    %s19 = ssub.s32 %s11, %s18
    %p20 = scmp.eq.s32.totalorder %s19, 0
    %s22 = sadd.s32 %s21, 1
    %s23 = scalar_select %p20, %s21, %s22
    %p26 = pneg %p20
    %p27 = scmp.eq.s32.totalorder %s11, 1
    %p28 = por %p26, %p27
    %p29 = scmp.ne.s32.totalorder %s21, %s24
    %p30 = scmp.eq.s32.totalorder %s11, 0
    %p31 = por %p29, %p30
    %p32 = scmp.ne.s32.totalorder %s21, %s24
    %p33 = scmp.eq.s32.totalorder %s16, 1
    %p34 = por %p32, %p33
    %p35 = scmp.ne.s32.totalorder %s24, %s25
    %p36 = scmp.eq.s32.totalorder %s16, 0
    %p37 = por %p35, %p36
    %p38 = scmp.ne.s32.totalorder %s24, %s25
    %p39 = scmp.eq.s32.totalorder %s17, 1
    %p40 = por %p38, %p39
    %p42 = scmp.ne.s32.totalorder %s25, %s41
    %p43 = scmp.eq.s32.totalorder %s17, 0
    %p44 = por %p42, %p43
    %s46 = sadd.s32 %s45, 1
    %p49 = scmp.eq.s32.totalorder %s11, 1
    %p50 = scmp.ne.s32.totalorder %s45, %s47
    %p51 = scmp.eq.s32.totalorder %s11, 0
    %p52 = por %p50, %p51
    %p53 = scmp.ne.s32.totalorder %s45, %s47
    %p54 = scmp.eq.s32.totalorder %s16, 1
    %p55 = por %p53, %p54
    %p56 = scmp.ne.s32.totalorder %s47, %s48
    %p57 = scmp.eq.s32.totalorder %s16, 0
    %p58 = por %p56, %p57
    %p59 = scmp.ne.s32.totalorder %s47, %s48
    %p60 = scmp.eq.s32.totalorder %s17, 1
    %p61 = por %p59, %p60
    %p63 = scmp.ne.s32.totalorder %s48, %s62
    %p64 = scmp.eq.s32.totalorder %s17, 0
    %p65 = por %p63, %p64
    %s66 = ssub.s32 %s11, %s18
    %p67 = scmp.eq.s32.totalorder %s66, 0
    %s69 = sadd.s32 %s68, 1
    %s70 = scalar_select %p67, %s68, %s69
    %p73 = pneg %p67
    %p74 = scmp.eq.s32.totalorder %s11, 1
    %p75 = por %p73, %p74
    %p76 = scmp.ne.s32.totalorder %s68, %s71
    %p77 = scmp.eq.s32.totalorder %s11, 0
    %p78 = por %p76, %p77
    %p79 = scmp.ne.s32.totalorder %s68, %s71
    %p80 = scmp.eq.s32.totalorder %s16, 1
    %p81 = por %p79, %p80
    %p82 = scmp.ne.s32.totalorder %s71, %s72
    %p83 = scmp.eq.s32.totalorder %s16, 0
    %p84 = por %p82, %p83
    %p85 = scmp.ne.s32.totalorder %s71, %s72
    %p86 = scmp.eq.s32.totalorder %s17, 1
    %p87 = por %p85, %p86
    %p89 = scmp.ne.s32.totalorder %s72, %s88
    %p90 = scmp.eq.s32.totalorder %s17, 0
    %p91 = por %p89, %p90
    %s92 = ssub.s32 %s11, %s18
    %p93 = scmp.eq.s32.totalorder %s92, 0
    %s95 = sadd.s32 %s94, 1
    %s96 = scalar_select %p93, %s94, %s95
    %p99 = pneg %p93
    %p100 = scmp.eq.s32.totalorder %s11, 1
    %p101 = por %p99, %p100
    %p102 = scmp.ne.s32.totalorder %s94, %s97
    %p103 = scmp.eq.s32.totalorder %s11, 0
    %p104 = por %p102, %p103
    %p105 = scmp.ne.s32.totalorder %s94, %s97
    %p106 = scmp.eq.s32.totalorder %s16, 1
    %p107 = por %p105, %p106
    %p108 = scmp.ne.s32.totalorder %s97, %s98
    %p109 = scmp.eq.s32.totalorder %s16, 0
    %p110 = por %p108, %p109
    %p111 = scmp.ne.s32.totalorder %s97, %s98
    %p112 = scmp.eq.s32.totalorder %s17, 1
    %p113 = por %p111, %p112
    %p115 = scmp.ne.s32.totalorder %s98, %s114
    %p116 = scmp.eq.s32.totalorder %s17, 0
    %p117 = por %p115, %p116
    %s118 = ssub.s32 %s11, %s18
    %p119 = scmp.eq.s32.totalorder %s118, 0
    %s121 = sadd.s32 %s120, 1
    %s122 = scalar_select %p119, %s120, %s121
    %p125 = pneg %p119
    %p126 = scmp.eq.s32.totalorder %s11, 1
    %p127 = por %p125, %p126
    %p128 = scmp.ne.s32.totalorder %s120, %s123
    %p129 = scmp.eq.s32.totalorder %s11, 0
    %p130 = por %p128, %p129
    %p131 = scmp.ne.s32.totalorder %s120, %s123
    %p132 = scmp.eq.s32.totalorder %s16, 1
    %p133 = por %p131, %p132
    %p134 = scmp.ne.s32.totalorder %s123, %s124
    %p135 = scmp.eq.s32.totalorder %s16, 0
    %p136 = por %p134, %p135
    %p137 = scmp.ne.s32.totalorder %s123, %s124
    %p138 = scmp.eq.s32.totalorder %s17, 1
    %p139 = por %p137, %p138
    %p141 = scmp.ne.s32.totalorder %s124, %s140
    %p142 = scmp.eq.s32.totalorder %s17, 0
    %p143 = por %p141, %p142
    %p144 = scmp.le.s32.totalorder 1, %s11
    %p145 = scmp.lt.s32.totalorder %s11, 3
    %p146 = pnand %p144, %p145
    %p147 = pneg %p146
    // Predicated region
    $region9: #{d1_forward.8} parent=5 // pred_check
      _
    $region10: #{d1_forward.8} parent=5 // pred_check_branch
      %149 = sbr.rel (%p146) target = $region12
    $region11: #{d1_forward.8} parent=5 // pred_region
      %s150 = ssub.s32 %s11, 1
      // Predicated region
      $region13: #{d1_forward.8} parent=11 // pred_check
        %p151 = pneg %p58
      $region14: #{d1_forward.8} parent=11 // pred_check_branch
        %153 = sbr.rel (%p151) target = $region16
      $region15: #{d1_forward.8} parent=11 // pred_region
        _
      $region16: #{d1_forward.8} parent=11 // pred_fallthru
        _
    $region12: #{d1_forward.8} parent=5 // pred_fallthru
      _
    %p154 = scmp.lt.s32.totalorder %s11, 2
    // Predicated region
    $region17: #{d1_forward.8} parent=5 // pred_check
      %p155 = pneg %p154
    $region18: #{d1_forward.8} parent=5 // pred_check_branch
      %157 = sbr.rel (%p155) target = $region20
    $region19: #{d1_forward.8} parent=5 // pred_region
      // Predicated region
      $region21: #{d1_forward.8} parent=19 // pred_check
        %p158 = pneg %p31
      $region22: #{d1_forward.8} parent=19 // pred_check_branch
        %160 = sbr.rel (%p158) target = $region24
      $region23: #{d1_forward.8} parent=19 // pred_region
        %s161 = smul.u32 2, %s11
        %p162 = scmp.lt.s32.totalorder %s161, 3
        %s163 = scalar_select %p162, %s161, 3
        %s164 = smul.addr %s163, 2
        %s165 = smul.addr %s164, 8
        %s166 = scalar_lea.vmem %s0, %s165
        %s167 = smul.u32 2, %s11
      $region24: #{d1_forward.8} parent=19 // pred_fallthru
        _
    $region20: #{d1_forward.8} parent=5 // pred_fallthru
      _
    %p168 = scmp.le.s32.totalorder 1, %s11
    %p169 = scmp.lt.s32.totalorder %s11, 3
    %p170 = pnand %p168, %p169
    %p171 = pneg %p170
    // Predicated region
    $region25: #{d1_forward.8} parent=5 // pred_check
      _
    $region26: #{d1_forward.8} parent=5 // pred_check_branch
      %173 = sbr.rel (%p170) target = $region28
    $region27: #{d1_forward.8} parent=5 // pred_region
      %s174 = ssub.s32 %s11, 1
      %s175 = smul.u32 2, %s16
      %p176 = scmp.lt.s32.totalorder %s175, 3
      %s177 = scalar_select %p176, %s175, 3
      %s178 = smul.addr %s177, 2
      %s179 = smul.addr %s178, 8
      %s180 = scalar_lea.vmem %s0, %s179
      %p181 = pneg %p37
      %p182 = pneg %p34
      %p183 = pneg %p58
      %p184 = pneg %p55
      %p185 = pneg %p84
      %p186 = pneg %p81
      %s187 = smul.u32 2, %s16
      %p188 = scmp.lt.s32.totalorder %s187, 3
      %s189 = scalar_select %p188, %s187, 3
      %s190 = smul.addr %s189, 8
      %s191 = scalar_lea.vmem %s2, %s190
      %p192 = pneg %p110
      %p193 = pneg %p107
      %p194 = scmp.lt.s32.totalorder %s16, 1
      %s195 = scalar_select %p194, %s16, 1
      %s196 = scalar_lea.vmem %s3, %s195
      %p197 = pneg %p136
      %p198 = pneg %p133
      %p199 = scmp.lt.s32.totalorder %s16, 1
      %s200 = scalar_select %p199, %s16, 1
      %s201 = scalar_lea.vmem %s4, %s200
      %s202 = smul.u32 2, %s16
      %p203 = scmp.lt.s32.totalorder %s202, 3
      %s204 = scalar_select %p203, %s202, 3
      %s205 = smul.addr %s204, 2
      %s206 = smul.addr %s205, 8
      %s207 = scalar_lea.vmem %s0, %s206
      %s208 = smul.u32 2, %s16
      %s209 = smul.u32 2, %s16
      %p210 = scmp.lt.s32.totalorder %s209, 3
      %s211 = scalar_select %p210, %s209, 3
      %s212 = smul.addr %s211, 8
      %s213 = scalar_lea.vmem %s2, %s212
      %s214 = smul.u32 2, %s16
      %p215 = scmp.lt.s32.totalorder %s16, 1
      %s216 = scalar_select %p215, %s16, 1
      %s217 = scalar_lea.vmem %s3, %s216
      %p218 = scmp.lt.s32.totalorder %s16, 1
      %s219 = scalar_select %p218, %s16, 1
      %s220 = scalar_lea.vmem %s4, %s219
      %v221 = vld [vmem:[%s207] sm:$0xff]
      %v222 = vld [vmem:[%s207 + $0x8] sm:$0xff]
      %v223 = vld [vmem:[%s207 + $0x10] sm:$0xff]
      %v224 = vld [vmem:[%s207 + $0x18] sm:$0xff]
      %v225 = vld [vmem:[%s1] sm:$0xff]
      %v226 = vld [vmem:[%s1 + $0x8] sm:$0xff]
      %v227 = vld [vmem:[%s1 + $0x10] sm:$0xff]
      %v228 = vld [vmem:[%s1 + $0x18] sm:$0xff]
      %v229 = vld [vmem:[%s1 + $0x20] sm:$0xff]
      %v230 = vld [vmem:[%s1 + $0x28] sm:$0xff]
      %v231 = vld [vmem:[%s1 + $0x30] sm:$0xff]
      %v232 = vld [vmem:[%s1 + $0x38] sm:$0xff]
      %v233 = vld [vmem:[%s1 + $0x40] sm:$0xff]
      %v234 = vld [vmem:[%s1 + $0x48] sm:$0xff]
      %v235 = vld [vmem:[%s1 + $0x50] sm:$0xff]
      %v236 = vld [vmem:[%s1 + $0x58] sm:$0xff]
      %v237 = vld [vmem:[%s1 + $0x60] sm:$0xff]
      %v238 = vld [vmem:[%s1 + $0x68] sm:$0xff]
      %v239 = vld [vmem:[%s1 + $0x70] sm:$0xff]
      %v240 = vld [vmem:[%s1 + $0x78] sm:$0xff]
      %v241 = vld [vmem:[%s1 + $0x80] sm:$0xff]
      %v242 = vld [vmem:[%s1 + $0x88] sm:$0xff]
      %v243 = vld [vmem:[%s1 + $0x90] sm:$0xff]
      %v244 = vld [vmem:[%s1 + $0x98] sm:$0xff]
      %v245 = vld [vmem:[%s1 + $0xa0] sm:$0xff]
      %v246 = vld [vmem:[%s1 + $0xa8] sm:$0xff]
      %v247 = vld [vmem:[%s1 + $0xb0] sm:$0xff]
      %v248 = vld [vmem:[%s1 + $0xb8] sm:$0xff]
      %v249 = vld [vmem:[%s1 + $0xc0] sm:$0xff]
      %v250 = vld [vmem:[%s1 + $0xc8] sm:$0xff]
      %v251 = vld [vmem:[%s1 + $0xd0] sm:$0xff]
      %v252 = vld [vmem:[%s1 + $0xd8] sm:$0xff]
      %v253 = vld [vmem:[%s1 + $0xe0] sm:$0xff]
      %v254 = vld [vmem:[%s1 + $0xe8] sm:$0xff]
      %v255 = vld [vmem:[%s1 + $0xf0] sm:$0xff]
      %v256 = vld [vmem:[%s1 + $0xf8] sm:$0xff]
      %257 = vmatprep.subr.mxu0 0.0
      %258 = vmatpush1.msra.mxu0 %v225
      %259 = vmatprep.subr.mxu0 0.0
      %260 = vmatpush1.msra.mxu0 %v226
      %261 = vmatprep.subr.mxu0 0.0
      %262 = vmatpush1.msra.mxu0 %v227
      %263 = vmatprep.subr.mxu0 0.0
      %264 = vmatpush1.msra.mxu0 %v228
      %265 = vmatprep.subr.mxu0 0.0
      %266 = vmatpush1.msra.mxu0 %v229
      %267 = vmatprep.subr.mxu0 0.0
      %268 = vmatpush1.msra.mxu0 %v230
      %269 = vmatprep.subr.mxu0 0.0
      %270 = vmatpush1.msra.mxu0 %v231
      %271 = vmatprep.subr.mxu0 0.0
      %272 = vmatpush1.msra.mxu0 %v232
      %273 = vmatprep.subr.mxu0 0.0
      %274 = vmatpush1.msra.mxu0 %v233
      %275 = vmatprep.subr.mxu0 0.0
      %276 = vmatpush1.msra.mxu0 %v234
      %277 = vmatprep.subr.mxu0 0.0
      %278 = vmatpush1.msra.mxu0 %v235
      %279 = vmatprep.subr.mxu0 0.0
      %280 = vmatpush1.msra.mxu0 %v236
      %281 = vmatprep.subr.mxu0 0.0
      %282 = vmatpush1.msra.mxu0 %v237
      %283 = vmatprep.subr.mxu0 0.0
      %284 = vmatpush1.msra.mxu0 %v238
      %285 = vmatprep.subr.mxu0 0.0
      %286 = vmatpush1.msra.mxu0 %v239
      %287 = vmatprep.subr.mxu0 0.0
      %288 = vmatpush1.msra.mxu0 %v240
      %289 = vmatprep.subr.mxu0 0.0
      %290 = vmatpush1.msra.mxu0 %v241
      %291 = vmatprep.subr.mxu0 0.0
      %292 = vmatpush1.msra.mxu0 %v242
      %293 = vmatprep.subr.mxu0 0.0
      %294 = vmatpush1.msra.mxu0 %v243
      %295 = vmatprep.subr.mxu0 0.0
      %296 = vmatpush1.msra.mxu0 %v244
      %297 = vmatprep.subr.mxu0 0.0
      %298 = vmatpush1.msra.mxu0 %v245
      %299 = vmatprep.subr.mxu0 0.0
      %300 = vmatpush1.msra.mxu0 %v246
      %301 = vmatprep.subr.mxu0 0.0
      %302 = vmatpush1.msra.mxu0 %v247
      %303 = vmatprep.subr.mxu0 0.0
      %304 = vmatpush1.msra.mxu0 %v248
      %305 = vmatprep.subr.mxu0 0.0
      %306 = vmatpush1.msra.mxu0 %v249
      %307 = vmatprep.subr.mxu0 0.0
      %308 = vmatpush1.msra.mxu0 %v250
      %309 = vmatprep.subr.mxu0 0.0
      %310 = vmatpush1.msra.mxu0 %v251
      %311 = vmatprep.subr.mxu0 0.0
      %312 = vmatpush1.msra.mxu0 %v252
      %313 = vmatprep.subr.mxu0 0.0
      %314 = vmatpush1.msra.mxu0 %v253
      %315 = vmatprep.subr.mxu0 0.0
      %316 = vmatpush1.msra.mxu0 %v254
      %317 = vmatprep.subr.mxu0 0.0
      %318 = vmatpush1.msra.mxu0 %v255
      %319 = vmatprep.subr.mxu0 0.0
      %320 = vmatpush1.msra.mxu0 %v256
      %321 = vmatprep.mubr.f32.mxu0 %v222
      %322 = vmatmul.mubr.f32.gmra.mrb[0].mxu0 %v221
      %v323 = vpop.f32.mrb[0].mxu0
      %v324 = vadd.f32 0.0, %v323
      %v325 = vpop.f32.mrb[0].mxu0
      %326 = vmatprep.mubr.f32.mxu0 %v224
      %327 = vmatmul.mubr.f32.gmra.mrb[0].mxu0 %v223
      %v328 = vpop.f32.mrb[0].mxu0
      %v329 = vadd.f32 0.0, %v328
      %v330 = vpop.f32.mrb[0].mxu0
      %331 = vdwg.mxu0
      %332 = vst [vmem:[%s213] sm:$0xff] %v324
      %333 = vst [vmem:[%s213 + $0x8] sm:$0xff] %v329
      %s334 = smul.u32 %s16, 16
      %s335 = ssub.s32 32, %s334
      %p336 = scmp.lt.s32.totalorder %s335, 16
      %s337 = scalar_select %p336, %s335, 16
      %v338 = vadd.f32 %v324, %v329
      %v339 = vrot.slane %v338, 4
      %v340 = vadd.f32 %v338, %v339
      %v341 = vrot.slane %v340, 2
      %v342 = vadd.f32 %v340, %v341
      %v343 = vrot.slane %v342, 1
      %v344 = vadd.f32 %v342, %v343
      %s345 = scvt.s32.f32 %s337
      %v346 = vstv %s345
      %v347 = vrcp.pop %v346
      %s348 = vtos %v347
      %v349 = vstv %s348
      %v350 = vmul.f32 %v344, %v349
      %v351 = vlaneseq
      %v352 = vshrl.u32 %v351, 7
      %v353 = vadd.s32 %v352, 8
      %v354 = vstv %s337
      %vm355 = vcmp.lt.s32.totalorder %v352, %v354
      %vm356 = vcmp.lt.s32.totalorder %v353, %v354
      %v357 = vsub.f32 %v324, %v350
      %v358 = vsub.f32 %v329, %v350
      %v359 = vsel %vm355, 1, 0
      %v360 = vsel %vm356, 1, 0
      %vm361 = vcmp.eq.s32.totalorder %v359, 1
      %vm362 = vcmp.eq.s32.totalorder %v360, 1
      %v363 = vsel %vm361, %v357, 0.0
      %v364 = vsel %vm362, %v358, 0.0
      %365 = vst [vmem:[%s217] sm:$0x1] %v344
      %v366 = vmul.f32 %v363, %v363
      %v367 = vmul.f32 %v364, %v364
      %v368 = vadd.f32 %v366, %v367
      %v369 = vrot.slane %v368, 4
      %v370 = vadd.f32 %v368, %v369
      %v371 = vrot.slane %v370, 2
      %v372 = vadd.f32 %v370, %v371
      %v373 = vrot.slane %v372, 1
      %v374 = vadd.f32 %v372, %v373
      %375 = vst [vmem:[%s220] sm:$0x1] %v374
      %s376 = smul.u32 2, %s16
      %p377 = scmp.lt.s32.totalorder %s376, 3
      %s378 = scalar_select %p377, %s376, 3
      %s379 = smul.addr %s378, 8
      %s380 = scalar_lea.vmem %s2, %s379
      %p381 = scmp.lt.s32.totalorder %s16, 1
      %s382 = scalar_select %p381, %s16, 1
      %s383 = scalar_lea.vmem %s3, %s382
      %p384 = scmp.lt.s32.totalorder %s16, 1
      %s385 = scalar_select %p384, %s16, 1
      %s386 = scalar_lea.vmem %s4, %s385
      // Predicated region
      $region29: #{d1_forward.8} parent=27 // pred_check
        %p387 = pneg %p81
      $region30: #{d1_forward.8} parent=27 // pred_check_branch
        %389 = sbr.rel (%p387) target = $region32
      $region31: #{d1_forward.8} parent=27 // pred_region
        %s390 = smul.u32 2, %s16
      $region32: #{d1_forward.8} parent=27 // pred_fallthru
        _
      // Predicated region
      $region33: #{d1_forward.8} parent=27 // pred_check
        %p391 = pneg %p107
      $region34: #{d1_forward.8} parent=27 // pred_check_branch
        %393 = sbr.rel (%p391) target = $region36
      $region35: #{d1_forward.8} parent=27 // pred_region
        _
      $region36: #{d1_forward.8} parent=27 // pred_fallthru
        _
      // Predicated region
      $region37: #{d1_forward.8} parent=27 // pred_check
        %p394 = pneg %p133
      $region38: #{d1_forward.8} parent=27 // pred_check_branch
        %396 = sbr.rel (%p394) target = $region40
      $region39: #{d1_forward.8} parent=27 // pred_region
        _
      $region40: #{d1_forward.8} parent=27 // pred_fallthru
        _
    $region28: #{d1_forward.8} parent=5 // pred_fallthru
      _
    %p397 = scmp.le.s32.totalorder 2, %s11
    // Predicated region
    $region41: #{d1_forward.8} parent=5 // pred_check
      %p398 = pneg %p397
    $region42: #{d1_forward.8} parent=5 // pred_check_branch
      %400 = sbr.rel (%p398) target = $region44
    $region43: #{d1_forward.8} parent=5 // pred_region
      %s401 = ssub.s32 %s11, 2
      // Predicated region
      $region45: #{d1_forward.8} parent=43 // pred_check
        %p402 = pneg %p87
      $region46: #{d1_forward.8} parent=43 // pred_check_branch
        %404 = sbr.rel (%p402) target = $region48
      $region47: #{d1_forward.8} parent=43 // pred_region
        %s405 = smul.u32 2, %s17
        %p406 = scmp.lt.s32.totalorder %s405, 3
        %s407 = scalar_select %p406, %s405, 3
        %s408 = smul.addr %s407, 8
        %s409 = scalar_lea.vmem %s2, %s408
      $region48: #{d1_forward.8} parent=43 // pred_fallthru
        _
      // Predicated region
      $region49: #{d1_forward.8} parent=43 // pred_check
        %p410 = pneg %p113
      $region50: #{d1_forward.8} parent=43 // pred_check_branch
        %412 = sbr.rel (%p410) target = $region52
      $region51: #{d1_forward.8} parent=43 // pred_region
        %p413 = scmp.lt.s32.totalorder %s17, 1
        %s414 = scalar_select %p413, %s17, 1
        %s415 = scalar_lea.vmem %s3, %s414
      $region52: #{d1_forward.8} parent=43 // pred_fallthru
        _
      // Predicated region
      $region53: #{d1_forward.8} parent=43 // pred_check
        %p416 = pneg %p139
      $region54: #{d1_forward.8} parent=43 // pred_check_branch
        %418 = sbr.rel (%p416) target = $region56
      $region55: #{d1_forward.8} parent=43 // pred_region
        %p419 = scmp.lt.s32.totalorder %s17, 1
        %s420 = scalar_select %p419, %s17, 1
        %s421 = scalar_lea.vmem %s4, %s420
      $region56: #{d1_forward.8} parent=43 // pred_fallthru
        _
    $region44: #{d1_forward.8} parent=5 // pred_fallthru
      _
  $region6: #{d1_forward.8} parent=0 // loop_footer
    %s15 = sadd.s32 1, %s11
  $region7: #{d1_forward.8} parent=0 // loop_footer_branch
    %10 = sbr.rel target = $region3
  $region8: #{d1_forward.8} parent=0 // loop_exit
    _

</llo_original>
